<compile_context>
chip_gen: v7x
topology: tpu7x:2x2x1
jax: 0.10.0
libtpu: 0.0.40
codegen_flags: <defaults>
</compile_context>

<pallas_src>
import functools

import jax
import jax.numpy as jnp
import numpy as np
from jax import lax
from jax.experimental import pallas as pl
from jax.experimental.pallas import tpu as pltpu


def _round_up(x, m):
    return (x + m - 1) // m * m


# -----------------------------------------------------------------------------
# Call 1: BN statistics (phase 0) + per-pillar max of post-BN/ReLU x (phase 1).
# Outputs:
#   ab_ref   : (2, Cout)   row 0 = BN scale a = gamma * rsqrt(var + eps)
#                          row 1 = BN shift b = beta - mean * a
#   xmax_ref : (P_pad, Cout) per-pillar max of relu(a*x + b)
# -----------------------------------------------------------------------------
def _stats_and_max_kernel(inv_ref, xin_ref, w_ref, gamma_ref, beta_ref,
                          ab_ref, xmax_ref, *, tile_n, n_true, eps, pillar_blk):
    ph = pl.program_id(0)   # 0 = accumulate stats, 1 = accumulate pillar max
    t = pl.program_id(1)    # point-tile index

    # Raw linear output for this point tile (f32 accumulate on the MXU).
    x = jnp.dot(xin_ref[...], w_ref[...], preferred_element_type=jnp.float32)  # (tile_n, Cout)

    # Row-validity mask for the zero-padded tail (N padded to a multiple of tile_n).
    row = t * tile_n + lax.broadcasted_iota(jnp.int32, (tile_n, 1), 0)
    valid = row < n_true                                                        # (tile_n, 1)

    @pl.when(jnp.logical_and(ph == 0, t == 0))
    def _init():
        ab_ref[...] = jnp.zeros_like(ab_ref)
        xmax_ref[...] = jnp.zeros_like(xmax_ref)   # 0-init is safe: post-ReLU maxima >= 0

    @pl.when(ph == 0)
    def _accumulate_stats():
        xv = jnp.where(valid, x, 0.0)
        s = jnp.sum(xv, axis=0, keepdims=True)          # (1, Cout)
        sq = jnp.sum(xv * xv, axis=0, keepdims=True)    # (1, Cout)  single-pass variance
        ab_ref[...] += jnp.concatenate([s, sq], axis=0)

    @pl.when(ph == 1)
    def _accumulate_pillar_max():
        @pl.when(t == 0)
        def _finalize_bn():
            inv_n = jnp.float32(1.0 / n_true)
            mean = ab_ref[0:1, :] * inv_n
            var = jnp.maximum(ab_ref[1:2, :] * inv_n - mean * mean, 0.0)
            a = gamma_ref[...] * lax.rsqrt(var + jnp.float32(eps))
            b = beta_ref[...] - mean * a
            ab_ref[...] = jnp.concatenate([a, b], axis=0)

        a = ab_ref[0:1, :]
        b = ab_ref[1:2, :]
        xbn = jnp.maximum(x * a + b, 0.0)
        xbn = jnp.where(valid, xbn, 0.0)     # padded rows contribute 0 => never change a max
        inv = inv_ref[...]                   # (tile_n, 1) int32 pillar id per point

        num_blocks = xmax_ref.shape[0] // pillar_blk

        # Pillar-blocked scatter-max: 8 pillars per iteration -> one reduce per pillar but a
        # single sublane-aligned (8, Cout) read-modify-write store per block.
        def body(pb, carry):
            base = pl.multiple_of(pb * pillar_blk, pillar_blk)
            rows = [jnp.max(jnp.where(inv == (base + j), xbn, 0.0),
                            axis=0, keepdims=True)
                    for j in range(pillar_blk)]
            blk = jnp.concatenate(rows, axis=0)                       # (pillar_blk, Cout)
            cur = xmax_ref[pl.ds(base, pillar_blk), :]
            xmax_ref[pl.ds(base, pillar_blk), :] = jnp.maximum(cur, blk)
            return carry

        lax.fori_loop(0, num_blocks, body, 0)


# -----------------------------------------------------------------------------
# Call 2: recompute X@W, BN+ReLU, gather x_max[unq_inv], single fused output store.
# -----------------------------------------------------------------------------
def _output_kernel(inv_ref, xin_ref, w_ref, ab_ref, xmax_ref, out_ref):
    x = jnp.dot(xin_ref[...], w_ref[...], preferred_element_type=jnp.float32)   # (tile_n, Cout)
    a = ab_ref[0:1, :]
    b = ab_ref[1:2, :]
    xbn = jnp.maximum(x * a + b, 0.0)

    idx = inv_ref[...][:, 0]                                   # (tile_n,) int32 pillar ids
    gathered = jnp.take(xmax_ref[...], idx, axis=0)            # direct VMEM row gather

    # One fused store instead of two column-sliced stores.
    # (A transposed (2*Cout, N) output layout would be fully lane-dense; kept NC here to
    #  match the PyTorch layout.)
    out_ref[...] = jnp.concatenate([xbn, gathered], axis=1)


def pfn_layer_v2(inputs, unq_inv, weight, gamma, beta, num_pillars,
                 *, eps=1e-3, tile_n=1024):
    """PFNLayerV2 forward (use_norm=True, last_layer=False).

    inputs: (N, Cin) f32, unq_inv: (N,) int32 pillar id per point (all of 0..P-1 present),
    weight: (Cin, Cout), gamma/beta: (Cout,). Returns (N, 2*Cout) f32.
    """
    n, cin = inputs.shape
    cout = weight.shape[1]

    tile_n = max(8, _round_up(min(tile_n, _round_up(n, 8)), 8))
    n_pad = _round_up(n, tile_n)
    p_pad = _round_up(max(int(num_pillars), 1), 8)
    nt = n_pad // tile_n

    x = jnp.asarray(inputs, jnp.float32)
    inv = jnp.asarray(unq_inv, jnp.int32).reshape(n)
    if n_pad != n:
        x = jnp.pad(x, ((0, n_pad - n), (0, 0)))
        inv = jnp.pad(inv, (0, n_pad - n))          # padded rows masked inside the kernel
    inv = inv.reshape(n_pad, 1)
    w = jnp.asarray(weight, jnp.float32)
    g = jnp.asarray(gamma, jnp.float32).reshape(1, cout)
    b = jnp.asarray(beta, jnp.float32).reshape(1, cout)

    # 32 MiB scoped VMEM comfortably covers double-buffered (tile_n x Cin/1/2*Cout) tiles plus
    # the resident (P_pad, Cout) xmax block on all of v5e/v6e/v7x at tile_n=1024.
    vmem_limit = 32 * 1024 * 1024

    # ---- call 1: global BN stats + per-pillar max (shared accumulators => "arbitrary") ----
    stats_kernel = functools.partial(
        _stats_and_max_kernel, tile_n=tile_n, n_true=n, eps=float(eps), pillar_blk=8)
    ab, xmax = pl.pallas_call(
        stats_kernel,
        grid=(2, nt),
        in_specs=[
            pl.BlockSpec((tile_n, 1), lambda ph, t: (t, 0)),      # unq_inv tile
            pl.BlockSpec((tile_n, cin), lambda ph, t: (t, 0)),    # inputs tile
            pl.BlockSpec((cin, cout), lambda ph, t: (0, 0)),      # weight (resident)
            pl.BlockSpec((1, cout), lambda ph, t: (0, 0)),        # gamma
            pl.BlockSpec((1, cout), lambda ph, t: (0, 0)),        # beta
        ],
        out_specs=(
            pl.BlockSpec((2, cout), lambda ph, t: (0, 0)),        # BN (a, b) accumulator
            pl.BlockSpec((p_pad, cout), lambda ph, t: (0, 0)),    # per-pillar max accumulator
        ),
        out_shape=(
            jax.ShapeDtypeStruct((2, cout), jnp.float32),
            jax.ShapeDtypeStruct((p_pad, cout), jnp.float32),
        ),
        compiler_params=pltpu.CompilerParams(
            dimension_semantics=("arbitrary", "arbitrary"),
            vmem_limit_bytes=vmem_limit),
        cost_estimate=pl.CostEstimate(
            flops=4 * n_pad * cin * cout + 10 * n_pad * cout,
            transcendentals=cout,
            bytes_accessed=2 * n_pad * (cin + 1) * 4 + (p_pad + 2 + cin) * cout * 4),
    )(inv, x, w, g, b)

    # ---- call 2: normalize + gather + write (independent tiles => "parallel") ----
    out = pl.pallas_call(
        _output_kernel,
        grid=(nt,),
        in_specs=[
            pl.BlockSpec((tile_n, 1), lambda t: (t, 0)),          # unq_inv tile
            pl.BlockSpec((tile_n, cin), lambda t: (t, 0)),        # inputs tile
            pl.BlockSpec((cin, cout), lambda t: (0, 0)),          # weight
            pl.BlockSpec((2, cout), lambda t: (0, 0)),            # BN (a, b)
            pl.BlockSpec((p_pad, cout), lambda t: (0, 0)),        # x_max (resident)
        ],
        out_specs=pl.BlockSpec((tile_n, 2 * cout), lambda t: (t, 0)),
        out_shape=jax.ShapeDtypeStruct((n_pad, 2 * cout), jnp.float32),
        compiler_params=pltpu.CompilerParams(
            dimension_semantics=("parallel",),
            vmem_limit_bytes=vmem_limit),
        cost_estimate=pl.CostEstimate(
            flops=2 * n_pad * cin * cout + 4 * n_pad * cout,
            transcendentals=0,
            bytes_accessed=n_pad * (cin + 1 + 2 * cout) * 4 + (p_pad + 2 + cin) * cout * 4),
    )(inv, x, w, ab, xmax)

    return out[:n]


def pfn_layer_v2_ref(inputs, unq_inv, weight, gamma, beta, num_pillars, eps=1e-3):
    x = inputs @ weight
    mean = x.mean(0, keepdims=True)
    var = ((x - mean) ** 2).mean(0, keepdims=True)
    x = (x - mean) / jnp.sqrt(var + eps) * gamma[None, :] + beta[None, :]
    x = jnp.maximum(x, 0.0)
    x_max = jax.ops.segment_max(x, unq_inv, num_segments=num_pillars)
    return jnp.concatenate([x, x_max[unq_inv]], axis=1)


if __name__ == "__main__":
    # PFNLayerV2(in_channels=10, out_channels=32, use_norm=True, last_layer=False)
    # -> internal out_channels = 32 // 2 = 16, output feature dim = 32.
    # N=250 with tile_n=64 exercises the multi-tile grid and the padded-row masking;
    # P=21 (padded to 24) exercises the 8-pillar-block scatter-max loop and pillar padding.
    N, C_IN, OUT_CHANNELS, P = 250, 10, 32, 21
    C_OUT = OUT_CHANNELS // 2
    TILE_N = 64

    key = jax.random.PRNGKey(0)
    k_in, k_w, k_inv, k_perm = jax.random.split(key, 4)

    inputs = jax.random.normal(k_in, (N, C_IN), dtype=jnp.float32)
    weight = 0.1 * jax.random.normal(k_w, (C_IN, C_OUT), dtype=jnp.float32)
    gamma = 1.0 + 0.05 * jnp.arange(C_OUT, dtype=jnp.float32)   # deterministic BN affine
    beta = 0.01 * jnp.arange(C_OUT, dtype=jnp.float32)

    # unq_inv: every pillar id 0..P-1 appears at least once (torch.unique inverse property).
    inv_tail = jax.random.randint(k_inv, (N - P,), 0, P, dtype=jnp.int32)
    unq_inv = jnp.concatenate([jnp.arange(P, dtype=jnp.int32), inv_tail])
    unq_inv = jax.random.permutation(k_perm, unq_inv)

    out = pfn_layer_v2(inputs, unq_inv, weight, gamma, beta, P, tile_n=TILE_N)
    out = jax.block_until_ready(out)

    ref = pfn_layer_v2_ref(inputs, unq_inv, weight, gamma, beta, P)
    assert out.shape == (N, 2 * C_OUT)
    np.testing.assert_allclose(np.asarray(out), np.asarray(ref), rtol=2e-3, atol=2e-3)

    print("KERNEL_OK")
</pallas_src>

<mosaic_0001>
module attributes {stable_mosaic.version = 11 : i64} {
  func.func @_stats_and_max_kernel(%arg0: i32, %arg1: i32, %arg2: memref<64x1xi32, #tpu.memory_space<vmem>>, %arg3: memref<64x10xf32, #tpu.memory_space<vmem>>, %arg4: memref<10x16xf32, #tpu.memory_space<vmem>>, %arg5: memref<1x16xf32, #tpu.memory_space<vmem>>, %arg6: memref<1x16xf32, #tpu.memory_space<vmem>>, %arg7: memref<2x16xf32, #tpu.memory_space<vmem>>, %arg8: memref<24x16xf32, #tpu.memory_space<vmem>>) attributes {dimension_semantics = [#tpu.dimension_semantics<arbitrary>, #tpu.dimension_semantics<arbitrary>], iteration_bounds = array<i64: 2, 4>, scalar_prefetch = 0 : i64, scratch_operands = 0 : i64, tpu.core_type = #tpu.core_type<tc>, window_params = [{transform_indices = @transform_0, window_bounds = array<i64: 64, 1>}, {transform_indices = @transform_1, window_bounds = array<i64: 64, 10>}, {pipeline_mode = #tpu.pipeline_mode<synchronous>, transform_indices = @transform_2, window_bounds = array<i64: 10, 16>}, {pipeline_mode = #tpu.pipeline_mode<synchronous>, transform_indices = @transform_3, window_bounds = array<i64: 1, 16>}, {pipeline_mode = #tpu.pipeline_mode<synchronous>, transform_indices = @transform_4, window_bounds = array<i64: 1, 16>}, {pipeline_mode = #tpu.pipeline_mode<synchronous>, transform_indices = @transform_5, window_bounds = array<i64: 2, 16>}, {pipeline_mode = #tpu.pipeline_mode<synchronous>, transform_indices = @transform_6, window_bounds = array<i64: 24, 16>}]} {
    %c0 = arith.constant 0 : index
    %c0_0 = arith.constant 0 : index
    %0 = vector.load %arg3[%c0, %c0_0] : memref<64x10xf32, #tpu.memory_space<vmem>>, vector<64x10xf32>
    %c0_1 = arith.constant 0 : index
    %c0_2 = arith.constant 0 : index
    %1 = vector.load %arg4[%c0_1, %c0_2] : memref<10x16xf32, #tpu.memory_space<vmem>>, vector<10x16xf32>
    %cst = arith.constant dense<0.000000e+00> : vector<64x16xf32>
    %2 = tpu.matmul %0, %1, %cst {dimension_numbers = #tpu.dot_dimension_numbers<[1], [0], [0], [1], [0, 0, 1, 1], [], []>} : vector<64x10xf32>, vector<10x16xf32>, vector<64x16xf32> -> vector<64x16xf32>
    %c64_i32 = arith.constant 64 : i32
    %3 = arith.muli %arg1, %c64_i32 : i32
    %4 = tpu.iota {dimensions = array<i32: 0>} : vector<64x1xi32>
    %5 = vector.broadcast %3 : i32 to vector<64x1xi32>
    %6 = arith.addi %5, %4 : vector<64x1xi32>
    %c250_i32 = arith.constant 250 : i32
    %7 = vector.broadcast %c250_i32 : i32 to vector<64x1xi32>
    %8 = arith.cmpi slt, %6, %7 : vector<64x1xi32>
    %c0_i32 = arith.constant 0 : i32
    %9 = arith.cmpi eq, %arg0, %c0_i32 : i32
    %c0_i32_3 = arith.constant 0 : i32
    %10 = arith.cmpi eq, %arg1, %c0_i32_3 : i32
    %11 = arith.andi %9, %10 : i1
    %12 = arith.extui %11 : i1 to i32
    %c0_i32_4 = arith.constant 0 : i32
    %13 = arith.cmpi ne, %12, %c0_i32_4 : i32
    scf.if %13 {
      %cst_8 = arith.constant 0.000000e+00 : f32
      %20 = vector.broadcast %cst_8 : f32 to vector<2x16xf32>
      %c0_9 = arith.constant 0 : index
      %c0_10 = arith.constant 0 : index
      %21 = vector.load %arg7[%c0_9, %c0_10] : memref<2x16xf32, #tpu.memory_space<vmem>>, vector<2x16xf32>
      tpu.vector_store %arg7[%c0_9, %c0_10], %20 {strides = array<i32>} : memref<2x16xf32, #tpu.memory_space<vmem>>, vector<2x16xf32>,
      %cst_11 = arith.constant 0.000000e+00 : f32
      %22 = vector.broadcast %cst_11 : f32 to vector<24x16xf32>
      %c0_12 = arith.constant 0 : index
      %c0_13 = arith.constant 0 : index
      %23 = vector.load %arg8[%c0_12, %c0_13] : memref<24x16xf32, #tpu.memory_space<vmem>>, vector<24x16xf32>
      tpu.vector_store %arg8[%c0_12, %c0_13], %22 {strides = array<i32>} : memref<24x16xf32, #tpu.memory_space<vmem>>, vector<24x16xf32>,
    } else {
    }
    %c0_i32_5 = arith.constant 0 : i32
    %14 = arith.cmpi eq, %arg0, %c0_i32_5 : i32
    %15 = arith.extui %14 : i1 to i32
    %c0_i32_6 = arith.constant 0 : i32
    %16 = arith.cmpi ne, %15, %c0_i32_6 : i32
    scf.if %16 {
      %cst_8 = arith.constant 0.000000e+00 : f32
      %20 = vector.shape_cast %8 : vector<64x1xi1> to vector<64x1xi1>
      %21 = vector.broadcast %20 : vector<64x1xi1> to vector<64x16xi1>
      %22 = vector.broadcast %cst_8 : f32 to vector<64x16xf32>
      %23 = arith.select %21, %2, %22 : vector<64x16xi1>, vector<64x16xf32>
      %cst_9 = arith.constant dense<0.000000e+00> : vector<16xf32>
      %24 = vector.multi_reduction <add>, %23, %cst_9 [0] : vector<64x16xf32> to vector<16xf32>
      %25 = vector.shape_cast %24 : vector<16xf32> to vector<1x16xf32>
      %26 = arith.mulf %23, %23 : vector<64x16xf32>
      %cst_10 = arith.constant dense<0.000000e+00> : vector<16xf32>
      %27 = vector.multi_reduction <add>, %26, %cst_10 [0] : vector<64x16xf32> to vector<16xf32>
      %28 = vector.shape_cast %27 : vector<16xf32> to vector<1x16xf32>
      %c0_11 = arith.constant 0 : index
      %c0_12 = arith.constant 0 : index
      %29 = vector.load %arg7[%c0_11, %c0_12] : memref<2x16xf32, #tpu.memory_space<vmem>>, vector<2x16xf32>
      %30 = tpu.concatenate %25, %28 in 0 : vector<1x16xf32>, vector<1x16xf32> -> vector<2x16xf32>
      %31 = arith.addf %29, %30 : vector<2x16xf32>
      %c0_13 = arith.constant 0 : index
      %c0_14 = arith.constant 0 : index
      %32 = vector.load %arg7[%c0_13, %c0_14] : memref<2x16xf32, #tpu.memory_space<vmem>>, vector<2x16xf32>
      tpu.vector_store %arg7[%c0_13, %c0_14], %31 {strides = array<i32>} : memref<2x16xf32, #tpu.memory_space<vmem>>, vector<2x16xf32>,
    } else {
    }
    %c1_i32 = arith.constant 1 : i32
    %17 = arith.cmpi eq, %arg0, %c1_i32 : i32
    %18 = arith.extui %17 : i1 to i32
    %c0_i32_7 = arith.constant 0 : i32
    %19 = arith.cmpi ne, %18, %c0_i32_7 : i32
    scf.if %19 {
      %c0_i32_8 = arith.constant 0 : i32
      %20 = arith.cmpi eq, %arg1, %c0_i32_8 : i32
      %21 = arith.extui %20 : i1 to i32
      %c0_i32_9 = arith.constant 0 : i32
      %22 = arith.cmpi ne, %21, %c0_i32_9 : i32
      scf.if %22 {
        %c0_20 = arith.constant 0 : index
        %c0_21 = arith.constant 0 : index
        %37 = vector.load %arg7[%c0_20, %c0_21] : memref<2x16xf32, #tpu.memory_space<vmem>>, vector<1x16xf32>
        %cst_22 = arith.constant 4.000000e-03 : f32
        %38 = vector.broadcast %cst_22 : f32 to vector<1x16xf32>
        %39 = arith.mulf %37, %38 : vector<1x16xf32>
        %c1_23 = arith.constant 1 : index
        %c0_24 = arith.constant 0 : index
        %40 = vector.load %arg7[%c1_23, %c0_24] : memref<2x16xf32, #tpu.memory_space<vmem>>, vector<1x16xf32>
        %cst_25 = arith.constant 4.000000e-03 : f32
        %41 = vector.broadcast %cst_25 : f32 to vector<1x16xf32>
        %42 = arith.mulf %40, %41 : vector<1x16xf32>
        %43 = arith.mulf %39, %39 : vector<1x16xf32>
        %44 = arith.subf %42, %43 : vector<1x16xf32>
        %cst_26 = arith.constant 0.000000e+00 : f32
        %45 = vector.broadcast %cst_26 : f32 to vector<1x16xf32>
        %46 = arith.maximumf %44, %45 : vector<1x16xf32>
        %c0_27 = arith.constant 0 : index
        %c0_28 = arith.constant 0 : index
        %47 = vector.load %arg5[%c0_27, %c0_28] : memref<1x16xf32, #tpu.memory_space<vmem>>, vector<1x16xf32>
        %cst_29 = arith.constant 1.000000e-03 : f32
        %48 = vector.broadcast %cst_29 : f32 to vector<1x16xf32>
        %49 = arith.addf %46, %48 : vector<1x16xf32>
        %50 = math.rsqrt %49 : vector<1x16xf32>
        %51 = arith.mulf %47, %50 : vector<1x16xf32>
        %c0_30 = arith.constant 0 : index
        %c0_31 = arith.constant 0 : index
        %52 = vector.load %arg6[%c0_30, %c0_31] : memref<1x16xf32, #tpu.memory_space<vmem>>, vector<1x16xf32>
        %53 = arith.mulf %39, %51 : vector<1x16xf32>
        %54 = arith.subf %52, %53 : vector<1x16xf32>
        %55 = tpu.concatenate %51, %54 in 0 : vector<1x16xf32>, vector<1x16xf32> -> vector<2x16xf32>
        %c0_32 = arith.constant 0 : index
        %c0_33 = arith.constant 0 : index
        %56 = vector.load %arg7[%c0_32, %c0_33] : memref<2x16xf32, #tpu.memory_space<vmem>>, vector<2x16xf32>
        tpu.vector_store %arg7[%c0_32, %c0_33], %55 {strides = array<i32>} : memref<2x16xf32, #tpu.memory_space<vmem>>, vector<2x16xf32>,
      } else {
      }
      %c0_10 = arith.constant 0 : index
      %c0_11 = arith.constant 0 : index
      %23 = vector.load %arg7[%c0_10, %c0_11] : memref<2x16xf32, #tpu.memory_space<vmem>>, vector<1x16xf32>
      %c1 = arith.constant 1 : index
      %c0_12 = arith.constant 0 : index
      %24 = vector.load %arg7[%c1, %c0_12] : memref<2x16xf32, #tpu.memory_space<vmem>>, vector<1x16xf32>
      %25 = vector.broadcast %23 : vector<1x16xf32> to vector<64x16xf32>
      %26 = arith.mulf %2, %25 : vector<64x16xf32>
      %27 = vector.broadcast %24 : vector<1x16xf32> to vector<64x16xf32>
      %28 = arith.addf %26, %27 : vector<64x16xf32>
      %cst_13 = arith.constant 0.000000e+00 : f32
      %29 = vector.broadcast %cst_13 : f32 to vector<64x16xf32>
      %30 = arith.maximumf %28, %29 : vector<64x16xf32>
      %cst_14 = arith.constant 0.000000e+00 : f32
      %31 = vector.shape_cast %8 : vector<64x1xi1> to vector<64x1xi1>
      %32 = vector.broadcast %31 : vector<64x1xi1> to vector<64x16xi1>
      %33 = vector.broadcast %cst_14 : f32 to vector<64x16xf32>
      %34 = arith.select %32, %30, %33 : vector<64x16xi1>, vector<64x16xf32>
      %c0_15 = arith.constant 0 : index
      %c0_16 = arith.constant 0 : index
      %35 = vector.load %arg2[%c0_15, %c0_16] : memref<64x1xi32, #tpu.memory_space<vmem>>, vector<64x1xi32>
      %c0_i32_17 = arith.constant 0 : i32
      %c3_i32 = arith.constant 3 : i32
      %36 = arith.addi %c0_i32_17, %c3_i32 : i32
      %c1_i32_18 = arith.constant 1 : i32
      scf.for %arg9 = %c0_i32_17 to %36 step %c1_i32_18  : i32 {
        %c8_i32 = arith.constant 8 : i32
        %37 = arith.muli %arg9, %c8_i32 : i32
        %38 = tpu.assume_multiple %37, 8 : i32
        %c0_i32_20 = arith.constant 0 : i32
        %39 = arith.addi %38, %c0_i32_20 : i32
        %40 = vector.broadcast %39 : i32 to vector<64x1xi32>
        %41 = arith.cmpi eq, %35, %40 : vector<64x1xi32>
        %cst_21 = arith.constant 0.000000e+00 : f32
        %42 = vector.shape_cast %41 : vector<64x1xi1> to vector<64x1xi1>
        %43 = vector.broadcast %42 : vector<64x1xi1> to vector<64x16xi1>
        %44 = vector.broadcast %cst_21 : f32 to vector<64x16xf32>
        %45 = arith.select %43, %34, %44 : vector<64x16xi1>, vector<64x16xf32>
        %cst_22 = arith.constant dense<0xFF800000> : vector<16xf32>
        %46 = vector.multi_reduction <maximumf>, %45, %cst_22 [0] : vector<64x16xf32> to vector<16xf32>
        %47 = vector.shape_cast %46 : vector<16xf32> to vector<1x16xf32>
        %c1_i32_23 = arith.constant 1 : i32
        %48 = arith.addi %38, %c1_i32_23 : i32
        %49 = vector.broadcast %48 : i32 to vector<64x1xi32>
        %50 = arith.cmpi eq, %35, %49 : vector<64x1xi32>
        %cst_24 = arith.constant 0.000000e+00 : f32
        %51 = vector.shape_cast %50 : vector<64x1xi1> to vector<64x1xi1>
        %52 = vector.broadcast %51 : vector<64x1xi1> to vector<64x16xi1>
        %53 = vector.broadcast %cst_24 : f32 to vector<64x16xf32>
        %54 = arith.select %52, %34, %53 : vector<64x16xi1>, vector<64x16xf32>
        %cst_25 = arith.constant dense<0xFF800000> : vector<16xf32>
        %55 = vector.multi_reduction <maximumf>, %54, %cst_25 [0] : vector<64x16xf32> to vector<16xf32>
        %56 = vector.shape_cast %55 : vector<16xf32> to vector<1x16xf32>
        %c2_i32 = arith.constant 2 : i32
        %57 = arith.addi %38, %c2_i32 : i32
        %58 = vector.broadcast %57 : i32 to vector<64x1xi32>
        %59 = arith.cmpi eq, %35, %58 : vector<64x1xi32>
        %cst_26 = arith.constant 0.000000e+00 : f32
        %60 = vector.shape_cast %59 : vector<64x1xi1> to vector<64x1xi1>
        %61 = vector.broadcast %60 : vector<64x1xi1> to vector<64x16xi1>
        %62 = vector.broadcast %cst_26 : f32 to vector<64x16xf32>
        %63 = arith.select %61, %34, %62 : vector<64x16xi1>, vector<64x16xf32>
        %cst_27 = arith.constant dense<0xFF800000> : vector<16xf32>
        %64 = vector.multi_reduction <maximumf>, %63, %cst_27 [0] : vector<64x16xf32> to vector<16xf32>
        %65 = vector.shape_cast %64 : vector<16xf32> to vector<1x16xf32>
        %c3_i32_28 = arith.constant 3 : i32
        %66 = arith.addi %38, %c3_i32_28 : i32
        %67 = vector.broadcast %66 : i32 to vector<64x1xi32>
        %68 = arith.cmpi eq, %35, %67 : vector<64x1xi32>
        %cst_29 = arith.constant 0.000000e+00 : f32
        %69 = vector.shape_cast %68 : vector<64x1xi1> to vector<64x1xi1>
        %70 = vector.broadcast %69 : vector<64x1xi1> to vector<64x16xi1>
        %71 = vector.broadcast %cst_29 : f32 to vector<64x16xf32>
        %72 = arith.select %70, %34, %71 : vector<64x16xi1>, vector<64x16xf32>
        %cst_30 = arith.constant dense<0xFF800000> : vector<16xf32>
        %73 = vector.multi_reduction <maximumf>, %72, %cst_30 [0] : vector<64x16xf32> to vector<16xf32>
        %74 = vector.shape_cast %73 : vector<16xf32> to vector<1x16xf32>
        %c4_i32 = arith.constant 4 : i32
        %75 = arith.addi %38, %c4_i32 : i32
        %76 = vector.broadcast %75 : i32 to vector<64x1xi32>
        %77 = arith.cmpi eq, %35, %76 : vector<64x1xi32>
        %cst_31 = arith.constant 0.000000e+00 : f32
        %78 = vector.shape_cast %77 : vector<64x1xi1> to vector<64x1xi1>
        %79 = vector.broadcast %78 : vector<64x1xi1> to vector<64x16xi1>
        %80 = vector.broadcast %cst_31 : f32 to vector<64x16xf32>
        %81 = arith.select %79, %34, %80 : vector<64x16xi1>, vector<64x16xf32>
        %cst_32 = arith.constant dense<0xFF800000> : vector<16xf32>
        %82 = vector.multi_reduction <maximumf>, %81, %cst_32 [0] : vector<64x16xf32> to vector<16xf32>
        %83 = vector.shape_cast %82 : vector<16xf32> to vector<1x16xf32>
        %c5_i32 = arith.constant 5 : i32
        %84 = arith.addi %38, %c5_i32 : i32
        %85 = vector.broadcast %84 : i32 to vector<64x1xi32>
        %86 = arith.cmpi eq, %35, %85 : vector<64x1xi32>
        %cst_33 = arith.constant 0.000000e+00 : f32
        %87 = vector.shape_cast %86 : vector<64x1xi1> to vector<64x1xi1>
        %88 = vector.broadcast %87 : vector<64x1xi1> to vector<64x16xi1>
        %89 = vector.broadcast %cst_33 : f32 to vector<64x16xf32>
        %90 = arith.select %88, %34, %89 : vector<64x16xi1>, vector<64x16xf32>
        %cst_34 = arith.constant dense<0xFF800000> : vector<16xf32>
        %91 = vector.multi_reduction <maximumf>, %90, %cst_34 [0] : vector<64x16xf32> to vector<16xf32>
        %92 = vector.shape_cast %91 : vector<16xf32> to vector<1x16xf32>
        %c6_i32 = arith.constant 6 : i32
        %93 = arith.addi %38, %c6_i32 : i32
        %94 = vector.broadcast %93 : i32 to vector<64x1xi32>
        %95 = arith.cmpi eq, %35, %94 : vector<64x1xi32>
        %cst_35 = arith.constant 0.000000e+00 : f32
        %96 = vector.shape_cast %95 : vector<64x1xi1> to vector<64x1xi1>
        %97 = vector.broadcast %96 : vector<64x1xi1> to vector<64x16xi1>
        %98 = vector.broadcast %cst_35 : f32 to vector<64x16xf32>
        %99 = arith.select %97, %34, %98 : vector<64x16xi1>, vector<64x16xf32>
        %cst_36 = arith.constant dense<0xFF800000> : vector<16xf32>
        %100 = vector.multi_reduction <maximumf>, %99, %cst_36 [0] : vector<64x16xf32> to vector<16xf32>
        %101 = vector.shape_cast %100 : vector<16xf32> to vector<1x16xf32>
        %c7_i32 = arith.constant 7 : i32
        %102 = arith.addi %38, %c7_i32 : i32
        %103 = vector.broadcast %102 : i32 to vector<64x1xi32>
        %104 = arith.cmpi eq, %35, %103 : vector<64x1xi32>
        %cst_37 = arith.constant 0.000000e+00 : f32
        %105 = vector.shape_cast %104 : vector<64x1xi1> to vector<64x1xi1>
        %106 = vector.broadcast %105 : vector<64x1xi1> to vector<64x16xi1>
        %107 = vector.broadcast %cst_37 : f32 to vector<64x16xf32>
        %108 = arith.select %106, %34, %107 : vector<64x16xi1>, vector<64x16xf32>
        %cst_38 = arith.constant dense<0xFF800000> : vector<16xf32>
        %109 = vector.multi_reduction <maximumf>, %108, %cst_38 [0] : vector<64x16xf32> to vector<16xf32>
        %110 = vector.shape_cast %109 : vector<16xf32> to vector<1x16xf32>
        %111 = tpu.concatenate %47, %56, %65, %74, %83, %92, %101, %110 in 0 : vector<1x16xf32>, vector<1x16xf32>, vector<1x16xf32>, vector<1x16xf32>, vector<1x16xf32>, vector<1x16xf32>, vector<1x16xf32>, vector<1x16xf32> -> vector<8x16xf32>
        %112 = arith.index_cast %38 : i32 to index
        %c0_39 = arith.constant 0 : index
        %113 = vector.load %arg8[%112, %c0_39] : memref<24x16xf32, #tpu.memory_space<vmem>>, vector<8x16xf32>
        %114 = arith.maximumf %113, %111 : vector<8x16xf32>
        %115 = arith.index_cast %38 : i32 to index
        %c0_40 = arith.constant 0 : index
        %116 = vector.load %arg8[%115, %c0_40] : memref<24x16xf32, #tpu.memory_space<vmem>>, vector<8x16xf32>
        tpu.vector_store %arg8[%115, %c0_40], %114 {strides = array<i32>} : memref<24x16xf32, #tpu.memory_space<vmem>>, vector<8x16xf32>,
      }
      %c3_i32_19 = arith.constant 3 : i32
    } else {
    }
    return
  }
  func.func @transform_0(%arg0: i32, %arg1: i32) -> (i32, i32) {
    %c0_i32 = arith.constant 0 : i32
    %c0_i32_0 = arith.constant 0 : i32
    return %arg1, %c0_i32 : i32, i32
  }
  func.func @transform_1(%arg0: i32, %arg1: i32) -> (i32, i32) {
    %c0_i32 = arith.constant 0 : i32
    %c0_i32_0 = arith.constant 0 : i32
    return %arg1, %c0_i32 : i32, i32
  }
  func.func @transform_2(%arg0: i32, %arg1: i32) -> (i32, i32) {
    %c0_i32 = arith.constant 0 : i32
    %c0_i32_0 = arith.constant 0 : i32
    %c0_i32_1 = arith.constant 0 : i32
    return %c0_i32, %c0_i32_0 : i32, i32
  }
  func.func @transform_3(%arg0: i32, %arg1: i32) -> (i32, i32) {
    %c0_i32 = arith.constant 0 : i32
    %c0_i32_0 = arith.constant 0 : i32
    %c0_i32_1 = arith.constant 0 : i32
    return %c0_i32, %c0_i32_0 : i32, i32
  }
  func.func @transform_4(%arg0: i32, %arg1: i32) -> (i32, i32) {
    %c0_i32 = arith.constant 0 : i32
    %c0_i32_0 = arith.constant 0 : i32
    %c0_i32_1 = arith.constant 0 : i32
    return %c0_i32, %c0_i32_0 : i32, i32
  }
  func.func @transform_5(%arg0: i32, %arg1: i32) -> (i32, i32) {
    %c0_i32 = arith.constant 0 : i32
    %c0_i32_0 = arith.constant 0 : i32
    %c0_i32_1 = arith.constant 0 : i32
    return %c0_i32, %c0_i32_0 : i32, i32
  }
  func.func @transform_6(%arg0: i32, %arg1: i32) -> (i32, i32) {
    %c0_i32 = arith.constant 0 : i32
    %c0_i32_0 = arith.constant 0 : i32
    %c0_i32_1 = arith.constant 0 : i32
    return %c0_i32, %c0_i32_0 : i32, i32
  }
}

</mosaic_0001>

<llo_original>
// kernel: tpu_custom_call.1
$region0: #{tpu_custom_call.1}
  #allocation0 [shape = 'u32[]', space=smem, size = 0x4, offset = 0x4, fixed_abs, tag = 'smem constant byte address 0x4 - core index']
  #allocation1 [shape = 'u32[144,128]{1,0:T(1,128)}', space=vmem, size = 0x12000, scoped, tag = 'internal scratch']
  %s0 = inlined_call_operand.vmem [shape: s32[256,1], index: 0, kind: input, shape index: {}]
  %s1 = inlined_call_operand.vmem [shape: f32[256,10], index: 1, kind: input, shape index: {}]
  %s2 = inlined_call_operand.vmem [shape: f32[10,16], index: 2, kind: input, shape index: {}]
  %s3 = inlined_call_operand.vmem [shape: f32[1,16], index: 3, kind: input, shape index: {}]
  %s4 = inlined_call_operand.vmem [shape: f32[1,16], index: 4, kind: input, shape index: {}]
  %s5 = inlined_call_operand.hbm [shape: f32[2,16], index: 5, kind: output, shape index: {0}]
  %s6 = inlined_call_operand.vmem [shape: f32[24,16], index: 6, kind: output, shape index: {1}]
  %7 = xla_tuple %s5, %s6
  %s8 = sld [smem:[#allocation0]]
  $region84: #{tpu_custom_call.1} parent=0
    _
  %s10 = ssub.s32 1, %s8
  %s11 = scalar_select 0, %s10, %s8
  $region1: #{tpu_custom_call.1} parent=0
    #allocation2 [shape = 'u8[1024]{0}', space=vmem, size = 0x400, scoped, tag = 'output window, operand 0, single buffered']
    #allocation3 [shape = 's32[2]{0}', space=sflag, size = 0x8, scoped, tag = 'scoped memory for tpu_custom_call.1']
    %12 = vsyncpa [#allocation3], 0
    loop: start=0, step=1, limit=10
    $region2: #{tpu_custom_call.1} parent=1 // loop_pre_header
      _
    $region3: #{tpu_custom_call.1} parent=1 // loop_header
      %s14 = sphi 0, %s18
      %p15 = scmp.ge.s32.totalorder %s14, 10
      %s21 = sphi 0, %s33
      %s22 = sphi 0, %s29
      %s23 = sphi 0, %s21
      %s24 = sphi 0, %s22
      %s25 = sphi 0, %s23
      %s26 = sphi 0, %s24
      %s36 = sphi 0, %s38
      %s39 = sphi 0, %s36
      %s40 = sphi 0, %s39
      %s56 = sphi 0, %s40
      %s62 = sphi 0, %s64
      %s65 = sphi 0, %s62
      %s66 = sphi 0, %s65
      %s82 = sphi 0, %s66
      %s86 = sphi 0, %s86
      %s88 = sphi 0, %s86
      %s89 = sphi 0, %s88
      %s103 = sphi 0, %s89
      %s107 = sphi 0, %s107
      %s109 = sphi 0, %s107
      %s110 = sphi 0, %s109
      %s124 = sphi 0, %s110
      %s128 = sphi 0, %s128
      %s130 = sphi 0, %s128
      %s131 = sphi 0, %s130
      %s145 = sphi 0, %s131
      %s149 = sphi 0, %s149
      %s151 = sphi 0, %s149
      %s152 = sphi 0, %s151
      %s166 = sphi 0, %s152
      %s170 = sphi 0, %s170
      %s172 = sphi 0, %s170
      %s173 = sphi 0, %s172
      %s187 = sphi 0, %s173
    $region4: #{tpu_custom_call.1} parent=1 // loop_header_branch
      %17 = sbr.rel (%p15) target = $region8
    $region5: #{tpu_custom_call.1} parent=1 // loop_body
      %s19 = ssub.s32 %s14, 1
      %s20 = ssub.s32 %s14, 2
      %s27 = sadd.s32 1, %s22
      %p28 = scmp.ge.s32.totalorder %s27, 4
      %s29 = scalar_select %p28, 0, %s27
      %s30 = sadd.s32 1, %s21
      %s31 = scalar_select %p28, %s30, %s21
      %p32 = scmp.ge.s32.totalorder %s31, 2
      %s33 = scalar_select %p32, 0, %s31
      %s34 = ssub.s32 %s22, %s29
      %p35 = scmp.eq.s32.totalorder %s34, 0
      %s37 = sadd.s32 %s36, 1
      %s38 = scalar_select %p35, %s36, %s37
      %p41 = pneg %p35
      %p42 = scmp.eq.s32.totalorder %s14, 7
      %p43 = por %p41, %p42
      %p44 = scmp.ne.s32.totalorder %s36, %s39
      %p45 = scmp.eq.s32.totalorder %s14, 0
      %p46 = por %p44, %p45
      %p47 = scmp.ne.s32.totalorder %s36, %s39
      %p48 = scmp.eq.s32.totalorder %s19, 7
      %p49 = por %p47, %p48
      %p50 = scmp.ne.s32.totalorder %s39, %s40
      %p51 = scmp.eq.s32.totalorder %s19, 0
      %p52 = por %p50, %p51
      %p53 = scmp.ne.s32.totalorder %s39, %s40
      %p54 = scmp.eq.s32.totalorder %s20, 7
      %p55 = por %p53, %p54
      %p57 = scmp.ne.s32.totalorder %s40, %s56
      %p58 = scmp.eq.s32.totalorder %s20, 0
      %p59 = por %p57, %p58
      %s60 = ssub.s32 %s22, %s29
      %p61 = scmp.eq.s32.totalorder %s60, 0
      %s63 = sadd.s32 %s62, 1
      %s64 = scalar_select %p61, %s62, %s63
      %p67 = pneg %p61
      %p68 = scmp.eq.s32.totalorder %s14, 7
      %p69 = por %p67, %p68
      %p70 = scmp.ne.s32.totalorder %s62, %s65
      %p71 = scmp.eq.s32.totalorder %s14, 0
      %p72 = por %p70, %p71
      %p73 = scmp.ne.s32.totalorder %s62, %s65
      %p74 = scmp.eq.s32.totalorder %s19, 7
      %p75 = por %p73, %p74
      %p76 = scmp.ne.s32.totalorder %s65, %s66
      %p77 = scmp.eq.s32.totalorder %s19, 0
      %p78 = por %p76, %p77
      %p79 = scmp.ne.s32.totalorder %s65, %s66
      %p80 = scmp.eq.s32.totalorder %s20, 7
      %p81 = por %p79, %p80
      %p83 = scmp.ne.s32.totalorder %s66, %s82
      %p84 = scmp.eq.s32.totalorder %s20, 0
      %p85 = por %p83, %p84
      %s87 = sadd.s32 %s86, 1
      %p90 = scmp.eq.s32.totalorder %s14, 7
      %p91 = scmp.ne.s32.totalorder %s86, %s88
      %p92 = scmp.eq.s32.totalorder %s14, 0
      %p93 = por %p91, %p92
      %p94 = scmp.ne.s32.totalorder %s86, %s88
      %p95 = scmp.eq.s32.totalorder %s19, 7
      %p96 = por %p94, %p95
      %p97 = scmp.ne.s32.totalorder %s88, %s89
      %p98 = scmp.eq.s32.totalorder %s19, 0
      %p99 = por %p97, %p98
      %p100 = scmp.ne.s32.totalorder %s88, %s89
      %p101 = scmp.eq.s32.totalorder %s20, 7
      %p102 = por %p100, %p101
      %p104 = scmp.ne.s32.totalorder %s89, %s103
      %p105 = scmp.eq.s32.totalorder %s20, 0
      %p106 = por %p104, %p105
      %s108 = sadd.s32 %s107, 1
      %p111 = scmp.eq.s32.totalorder %s14, 7
      %p112 = scmp.ne.s32.totalorder %s107, %s109
      %p113 = scmp.eq.s32.totalorder %s14, 0
      %p114 = por %p112, %p113
      %p115 = scmp.ne.s32.totalorder %s107, %s109
      %p116 = scmp.eq.s32.totalorder %s19, 7
      %p117 = por %p115, %p116
      %p118 = scmp.ne.s32.totalorder %s109, %s110
      %p119 = scmp.eq.s32.totalorder %s19, 0
      %p120 = por %p118, %p119
      %p121 = scmp.ne.s32.totalorder %s109, %s110
      %p122 = scmp.eq.s32.totalorder %s20, 7
      %p123 = por %p121, %p122
      %p125 = scmp.ne.s32.totalorder %s110, %s124
      %p126 = scmp.eq.s32.totalorder %s20, 0
      %p127 = por %p125, %p126
      %s129 = sadd.s32 %s128, 1
      %p132 = scmp.eq.s32.totalorder %s14, 7
      %p133 = scmp.ne.s32.totalorder %s128, %s130
      %p134 = scmp.eq.s32.totalorder %s14, 0
      %p135 = por %p133, %p134
      %p136 = scmp.ne.s32.totalorder %s128, %s130
      %p137 = scmp.eq.s32.totalorder %s19, 7
      %p138 = por %p136, %p137
      %p139 = scmp.ne.s32.totalorder %s130, %s131
      %p140 = scmp.eq.s32.totalorder %s19, 0
      %p141 = por %p139, %p140
      %p142 = scmp.ne.s32.totalorder %s130, %s131
      %p143 = scmp.eq.s32.totalorder %s20, 7
      %p144 = por %p142, %p143
      %p146 = scmp.ne.s32.totalorder %s131, %s145
      %p147 = scmp.eq.s32.totalorder %s20, 0
      %p148 = por %p146, %p147
      %s150 = sadd.s32 %s149, 1
      %p153 = scmp.eq.s32.totalorder %s14, 7
      %p154 = scmp.ne.s32.totalorder %s149, %s151
      %p155 = scmp.eq.s32.totalorder %s14, 0
      %p156 = por %p154, %p155
      %p157 = scmp.ne.s32.totalorder %s149, %s151
      %p158 = scmp.eq.s32.totalorder %s19, 7
      %p159 = por %p157, %p158
      %p160 = scmp.ne.s32.totalorder %s151, %s152
      %p161 = scmp.eq.s32.totalorder %s19, 0
      %p162 = por %p160, %p161
      %p163 = scmp.ne.s32.totalorder %s151, %s152
      %p164 = scmp.eq.s32.totalorder %s20, 7
      %p165 = por %p163, %p164
      %p167 = scmp.ne.s32.totalorder %s152, %s166
      %p168 = scmp.eq.s32.totalorder %s20, 0
      %p169 = por %p167, %p168
      %s171 = sadd.s32 %s170, 1
      %p174 = scmp.eq.s32.totalorder %s14, 7
      %p175 = scmp.ne.s32.totalorder %s170, %s172
      %p176 = scmp.eq.s32.totalorder %s14, 0
      %p177 = por %p175, %p176
      %p178 = scmp.ne.s32.totalorder %s170, %s172
      %p179 = scmp.eq.s32.totalorder %s19, 7
      %p180 = por %p178, %p179
      %p181 = scmp.ne.s32.totalorder %s172, %s173
      %p182 = scmp.eq.s32.totalorder %s19, 0
      %p183 = por %p181, %p182
      %p184 = scmp.ne.s32.totalorder %s172, %s173
      %p185 = scmp.eq.s32.totalorder %s20, 7
      %p186 = por %p184, %p185
      %p188 = scmp.ne.s32.totalorder %s173, %s187
      %p189 = scmp.eq.s32.totalorder %s20, 0
      %p190 = por %p188, %p189
      %p191 = scmp.le.s32.totalorder 1, %s14
      %p192 = scmp.lt.s32.totalorder %s14, 9
      %p193 = pnand %p191, %p192
      %p194 = pneg %p193
      // Predicated region
      $region9: #{tpu_custom_call.1} parent=5 // pred_check
        _
      $region10: #{tpu_custom_call.1} parent=5 // pred_check_branch
        %196 = sbr.rel (%p193) target = $region12
      $region11: #{tpu_custom_call.1} parent=5 // pred_region
        %s197 = ssub.s32 %s14, 1
        // Predicated region
        $region13: #{tpu_custom_call.1} parent=11 // pred_check
          %p198 = pneg %p99
        $region14: #{tpu_custom_call.1} parent=11 // pred_check_branch
          %200 = sbr.rel (%p198) target = $region16
        $region15: #{tpu_custom_call.1} parent=11 // pred_region
          _
        $region16: #{tpu_custom_call.1} parent=11 // pred_fallthru
          _
        // Predicated region
        $region17: #{tpu_custom_call.1} parent=11 // pred_check
          %p201 = pneg %p120
        $region18: #{tpu_custom_call.1} parent=11 // pred_check_branch
          %203 = sbr.rel (%p201) target = $region20
        $region19: #{tpu_custom_call.1} parent=11 // pred_region
          _
        $region20: #{tpu_custom_call.1} parent=11 // pred_fallthru
          _
        // Predicated region
        $region21: #{tpu_custom_call.1} parent=11 // pred_check
          %p204 = pneg %p141
        $region22: #{tpu_custom_call.1} parent=11 // pred_check_branch
          %206 = sbr.rel (%p204) target = $region24
        $region23: #{tpu_custom_call.1} parent=11 // pred_region
          _
        $region24: #{tpu_custom_call.1} parent=11 // pred_fallthru
          _
      $region12: #{tpu_custom_call.1} parent=5 // pred_fallthru
        _
      %p207 = scmp.lt.s32.totalorder %s14, 8
      // Predicated region
      $region25: #{tpu_custom_call.1} parent=5 // pred_check
        %p208 = pneg %p207
      $region26: #{tpu_custom_call.1} parent=5 // pred_check_branch
        %210 = sbr.rel (%p208) target = $region28
      $region27: #{tpu_custom_call.1} parent=5 // pred_region
        // Predicated region
        $region29: #{tpu_custom_call.1} parent=27 // pred_check
          %p211 = pneg %p46
        $region30: #{tpu_custom_call.1} parent=27 // pred_check_branch
          %213 = sbr.rel (%p211) target = $region32
        $region31: #{tpu_custom_call.1} parent=27 // pred_region
          %s214 = smul.u32 8, %s22
          %p215 = scmp.lt.s32.totalorder %s214, 31
          %s216 = scalar_select %p215, %s214, 31
          %s217 = smul.addr %s216, 8
          %s218 = scalar_lea.vmem %s0, %s217
          %s219 = smul.u32 8, %s22
        $region32: #{tpu_custom_call.1} parent=27 // pred_fallthru
          _
        // Predicated region
        $region33: #{tpu_custom_call.1} parent=27 // pred_check
          %p220 = pneg %p72
        $region34: #{tpu_custom_call.1} parent=27 // pred_check_branch
          %222 = sbr.rel (%p220) target = $region36
        $region35: #{tpu_custom_call.1} parent=27 // pred_region
          %s223 = smul.u32 8, %s22
          %p224 = scmp.lt.s32.totalorder %s223, 31
          %s225 = scalar_select %p224, %s223, 31
          %s226 = smul.addr %s225, 8
          %s227 = scalar_lea.vmem %s1, %s226
          %s228 = smul.u32 8, %s22
        $region36: #{tpu_custom_call.1} parent=27 // pred_fallthru
          _
      $region28: #{tpu_custom_call.1} parent=5 // pred_fallthru
        _
      %p229 = scmp.le.s32.totalorder 1, %s14
      %p230 = scmp.lt.s32.totalorder %s14, 9
      %p231 = pnand %p229, %p230
      %p232 = pneg %p231
      // Predicated region
      $region37: #{tpu_custom_call.1} parent=5 // pred_check
        _
      $region38: #{tpu_custom_call.1} parent=5 // pred_check_branch
        %234 = sbr.rel (%p231) target = $region40
      $region39: #{tpu_custom_call.1} parent=5 // pred_region
        %s235 = ssub.s32 %s14, 1
        %s236 = smul.u32 8, %s24
        %p237 = scmp.lt.s32.totalorder %s236, 31
        %s238 = scalar_select %p237, %s236, 31
        %s239 = smul.addr %s238, 8
        %s240 = scalar_lea.vmem %s0, %s239
        %p241 = pneg %p52
        %p242 = pneg %p49
        %s243 = smul.u32 8, %s24
        %p244 = scmp.lt.s32.totalorder %s243, 31
        %s245 = scalar_select %p244, %s243, 31
        %s246 = smul.addr %s245, 8
        %s247 = scalar_lea.vmem %s1, %s246
        %p248 = pneg %p78
        %p249 = pneg %p75
        %p250 = pneg %p99
        %p251 = pneg %p96
        %p252 = pneg %p120
        %p253 = pneg %p117
        %p254 = pneg %p141
        %p255 = pneg %p138
        %p256 = pneg %p162
        %p257 = pneg %p159
        %p258 = pneg %p183
        %p259 = pneg %p180
        %s260 = smul.u32 8, %s24
        %p261 = scmp.lt.s32.totalorder %s260, 31
        %s262 = scalar_select %p261, %s260, 31
        %s263 = smul.addr %s262, 8
        %s264 = scalar_lea.vmem %s0, %s263
        %s265 = smul.u32 8, %s24
        %s266 = smul.u32 8, %s24
        %p267 = scmp.lt.s32.totalorder %s266, 31
        %s268 = scalar_select %p267, %s266, 31
        %s269 = smul.addr %s268, 8
        %s270 = scalar_lea.vmem %s1, %s269
        %s271 = smul.u32 8, %s24
        %v272 = vld [vmem:[%s270] sm:$0xff]
        %v273 = vld [vmem:[%s270 + $0x8] sm:$0xff]
        %v274 = vld [vmem:[%s270 + $0x10] sm:$0xff]
        %v275 = vld [vmem:[%s270 + $0x18] sm:$0xff]
        %v276 = vld [vmem:[%s270 + $0x20] sm:$0xff]
        %v277 = vld [vmem:[%s270 + $0x28] sm:$0xff]
        %v278 = vld [vmem:[%s270 + $0x30] sm:$0xff]
        %v279 = vld [vmem:[%s270 + $0x38] sm:$0xff]
        %v280 = vld [vmem:[%s2] sm:$0xff]
        %v281 = vld [vmem:[%s2 + $0x8] sm:$0x3]
        %vm282 = vcmask 80896
        %v284 = vsel %vm282, %v272, 0
        %v287 = vsel %vm282, %v273, 0
        %v290 = vsel %vm282, %v274, 0
        %v293 = vsel %vm282, %v275, 0
        %v296 = vsel %vm282, %v276, 0
        %v299 = vsel %vm282, %v277, 0
        %v302 = vsel %vm282, %v278, 0
        %v305 = vsel %vm282, %v279, 0
        %vm307 = vcmask 1041408
        %v309 = vsel %vm307, %v281, 0
        %311 = vmatprep.subr.mxu0 0.0
        %312 = vmatpush1.msra.mxu0 %v280
        %313 = vmatprep.subr.mxu0 0.0
        %314 = vmatpush1.msra.mxu0 %v309
        %315 = vmatprep.subr.mxu0 0.0
        %316 = vmatpush1.msra.mxu0 0.0
        %317 = vmatprep.subr.mxu0 0.0
        %318 = vmatpush1.msra.mxu0 0.0
        %319 = vmatprep.subr.mxu0 0.0
        %320 = vmatpush1.msra.mxu0 0.0
        %321 = vmatprep.subr.mxu0 0.0
        %322 = vmatpush1.msra.mxu0 0.0
        %323 = vmatprep.subr.mxu0 0.0
        %324 = vmatpush1.msra.mxu0 0.0
        %325 = vmatprep.subr.mxu0 0.0
        %326 = vmatpush1.msra.mxu0 0.0
        %327 = vmatprep.subr.mxu0 0.0
        %328 = vmatpush1.msra.mxu0 0.0
        %329 = vmatprep.subr.mxu0 0.0
        %330 = vmatpush1.msra.mxu0 0.0
        %331 = vmatprep.subr.mxu0 0.0
        %332 = vmatpush1.msra.mxu0 0.0
        %333 = vmatprep.subr.mxu0 0.0
        %334 = vmatpush1.msra.mxu0 0.0
        %335 = vmatprep.subr.mxu0 0.0
        %336 = vmatpush1.msra.mxu0 0.0
        %337 = vmatprep.subr.mxu0 0.0
        %338 = vmatpush1.msra.mxu0 0.0
        %339 = vmatprep.subr.mxu0 0.0
        %340 = vmatpush1.msra.mxu0 0.0
        %341 = vmatprep.subr.mxu0 0.0
        %342 = vmatpush1.msra.mxu0 0.0
        %343 = vmatprep.subr.mxu0 0.0
        %344 = vmatpush1.msra.mxu0 0.0
        %345 = vmatprep.subr.mxu0 0.0
        %346 = vmatpush1.msra.mxu0 0.0
        %347 = vmatprep.subr.mxu0 0.0
        %348 = vmatpush1.msra.mxu0 0.0
        %349 = vmatprep.subr.mxu0 0.0
        %350 = vmatpush1.msra.mxu0 0.0
        %351 = vmatprep.subr.mxu0 0.0
        %352 = vmatpush1.msra.mxu0 0.0
        %353 = vmatprep.subr.mxu0 0.0
        %354 = vmatpush1.msra.mxu0 0.0
        %355 = vmatprep.subr.mxu0 0.0
        %356 = vmatpush1.msra.mxu0 0.0
        %357 = vmatprep.subr.mxu0 0.0
        %358 = vmatpush1.msra.mxu0 0.0
        %359 = vmatprep.subr.mxu0 0.0
        %360 = vmatpush1.msra.mxu0 0.0
        %361 = vmatprep.subr.mxu0 0.0
        %362 = vmatpush1.msra.mxu0 0.0
        %363 = vmatprep.subr.mxu0 0.0
        %364 = vmatpush1.msra.mxu0 0.0
        %365 = vmatprep.subr.mxu0 0.0
        %366 = vmatpush1.msra.mxu0 0.0
        %367 = vmatprep.subr.mxu0 0.0
        %368 = vmatpush1.msra.mxu0 0.0
        %369 = vmatprep.subr.mxu0 0.0
        %370 = vmatpush1.msra.mxu0 0.0
        %371 = vmatprep.subr.mxu0 0.0
        %372 = vmatpush1.msra.mxu0 0.0
        %373 = vmatprep.subr.mxu0 0.0
        %374 = vmatpush1.msra.mxu0 0.0
        %375 = vmatprep.mubr.f32.mxu0 0.0
        %376 = vmatmul.mubr.f32.gmra.mrb[0].mxu0 %v284
        %v377 = vpop.f32.mrb[0].mxu0
        %v378 = vadd.f32 0.0, %v377
        %v379 = vpop.f32.mrb[0].mxu0
        %380 = vmatprep.mubr.f32.mxu0 0.0
        %381 = vmatmul.mubr.f32.gmra.mrb[0].mxu0 %v287
        %v382 = vpop.f32.mrb[0].mxu0
        %v383 = vadd.f32 0.0, %v382
        %v384 = vpop.f32.mrb[0].mxu0
        %385 = vmatprep.mubr.f32.mxu0 0.0
        %386 = vmatmul.mubr.f32.gmra.mrb[0].mxu0 %v290
        %v387 = vpop.f32.mrb[0].mxu0
        %v388 = vadd.f32 0.0, %v387
        %v389 = vpop.f32.mrb[0].mxu0
        %390 = vmatprep.mubr.f32.mxu0 0.0
        %391 = vmatmul.mubr.f32.gmra.mrb[0].mxu0 %v293
        %v392 = vpop.f32.mrb[0].mxu0
        %v393 = vadd.f32 0.0, %v392
        %v394 = vpop.f32.mrb[0].mxu0
        %395 = vmatprep.mubr.f32.mxu0 0.0
        %396 = vmatmul.mubr.f32.gmra.mrb[0].mxu0 %v296
        %v397 = vpop.f32.mrb[0].mxu0
        %v398 = vadd.f32 0.0, %v397
        %v399 = vpop.f32.mrb[0].mxu0
        %400 = vmatprep.mubr.f32.mxu0 0.0
        %401 = vmatmul.mubr.f32.gmra.mrb[0].mxu0 %v299
        %v402 = vpop.f32.mrb[0].mxu0
        %v403 = vadd.f32 0.0, %v402
        %v404 = vpop.f32.mrb[0].mxu0
        %405 = vmatprep.mubr.f32.mxu0 0.0
        %406 = vmatmul.mubr.f32.gmra.mrb[0].mxu0 %v302
        %v407 = vpop.f32.mrb[0].mxu0
        %v408 = vadd.f32 0.0, %v407
        %v409 = vpop.f32.mrb[0].mxu0
        %410 = vmatprep.mubr.f32.mxu0 0.0
        %411 = vmatmul.mubr.f32.gmra.mrb[0].mxu0 %v305
        %v412 = vpop.f32.mrb[0].mxu0
        %v413 = vadd.f32 0.0, %v412
        %v414 = vpop.f32.mrb[0].mxu0
        %415 = vdwg.mxu0
        %s416 = smul.u32 %s24, 64
        %v417 = vlaneseq
        %v418 = vshrl.u32 %v417, 7
        %v419 = vadd.s32 %v418, 8
        %v420 = vadd.s32 %v418, 16
        %v421 = vadd.s32 %v418, 24
        %v422 = vadd.s32 %v418, 32
        %v423 = vadd.s32 %v418, 40
        %v424 = vadd.s32 %v418, 48
        %v425 = vadd.s32 %v418, 56
        %v426 = vstv %s416
        %v427 = vadd.s32 %v426, %v418
        %v428 = vadd.s32 %v426, %v419
        %v429 = vadd.s32 %v426, %v420
        %v430 = vadd.s32 %v426, %v421
        %v431 = vadd.s32 %v426, %v422
        %v432 = vadd.s32 %v426, %v423
        %v433 = vadd.s32 %v426, %v424
        %v434 = vadd.s32 %v426, %v425
        %vm435 = vcmp.lt.s32.totalorder %v427, 250
        %vm436 = vcmp.lt.s32.totalorder %v428, 250
        %vm437 = vcmp.lt.s32.totalorder %v429, 250
        %vm438 = vcmp.lt.s32.totalorder %v430, 250
        %vm439 = vcmp.lt.s32.totalorder %v431, 250
        %vm440 = vcmp.lt.s32.totalorder %v432, 250
        %vm441 = vcmp.lt.s32.totalorder %v433, 250
        %vm442 = vcmp.lt.s32.totalorder %v434, 250
        %p443 = scmp.eq.s32.totalorder %s23, 0
        %p444 = scmp.eq.s32.totalorder %s24, 0
        %p445 = pnand %p443, %p444
        %p446 = pneg %p445
        // Predicated region
        $region41: #{tpu_custom_call.1} parent=39 // pred_check
          _
        $region42: #{tpu_custom_call.1} parent=39 // pred_check_branch
          %448 = sbr.rel (%p445) target = $region44
        $region43: #{tpu_custom_call.1} parent=39 // pred_region
          %vm449 = vcmask 123904
          %450 = vst.msk [vmem:[#allocation2] sm:$0x3] %vm449, 0.0
          %vm451 = vcmask 130048
          %452 = vst.msk [vmem:[%s6] sm:$0xff] %vm451, 0.0
          %453 = vst.msk [vmem:[%s6 + $0x8] sm:$0xff] %vm451, 0.0
          %454 = vst.msk [vmem:[%s6 + $0x10] sm:$0xff] %vm451, 0.0
        $region44: #{tpu_custom_call.1} parent=39 // pred_fallthru
          _
        // Predicated region
        $region45: #{tpu_custom_call.1} parent=39 // pred_check
          %p455 = pneg %p443
        $region46: #{tpu_custom_call.1} parent=39 // pred_check_branch
          %457 = sbr.rel (%p455) target = $region48
        $region47: #{tpu_custom_call.1} parent=39 // pred_region
          %v458 = vsel %vm435, 1, 0
          %v459 = vsel %vm436, 1, 0
          %v460 = vsel %vm437, 1, 0
          %v461 = vsel %vm438, 1, 0
          %v462 = vsel %vm439, 1, 0
          %v463 = vsel %vm440, 1, 0
          %v464 = vsel %vm441, 1, 0
          %v465 = vsel %vm442, 1, 0
          %vm466 = vcmp.eq.s32.totalorder %v458, 1
          %vm467 = vcmp.eq.s32.totalorder %v459, 1
          %vm468 = vcmp.eq.s32.totalorder %v460, 1
          %vm469 = vcmp.eq.s32.totalorder %v461, 1
          %vm470 = vcmp.eq.s32.totalorder %v462, 1
          %vm471 = vcmp.eq.s32.totalorder %v463, 1
          %vm472 = vcmp.eq.s32.totalorder %v464, 1
          %vm473 = vcmp.eq.s32.totalorder %v465, 1
          %v474 = vsel %vm466, %v378, 0.0
          %v475 = vsel %vm467, %v383, 0.0
          %v476 = vsel %vm468, %v388, 0.0
          %v477 = vsel %vm469, %v393, 0.0
          %v478 = vsel %vm470, %v398, 0.0
          %v479 = vsel %vm471, %v403, 0.0
          %v480 = vsel %vm472, %v408, 0.0
          %v481 = vsel %vm473, %v413, 0.0
          %vm482 = vcmask 130048
          %v483 = vsel %vm482, %v474, 0.0
          %v484 = vsel %vm482, %v475, 0.0
          %v485 = vadd.f32 %v483, %v484
          %v486 = vsel %vm482, %v476, 0.0
          %v487 = vadd.f32 %v485, %v486
          %v488 = vsel %vm482, %v477, 0.0
          %v489 = vadd.f32 %v487, %v488
          %v490 = vsel %vm482, %v478, 0.0
          %v491 = vadd.f32 %v489, %v490
          %v492 = vsel %vm482, %v479, 0.0
          %v493 = vadd.f32 %v491, %v492
          %v494 = vsel %vm482, %v480, 0.0
          %v495 = vadd.f32 %v493, %v494
          %v496 = vsel %vm482, %v481, 0.0
          %v497 = vadd.f32 %v495, %v496
          %v498 = vrot.slane %v497, 4
          %v499 = vadd.f32 %v497, %v498
          %v500 = vrot.slane %v499, 2
          %v501 = vadd.f32 %v499, %v500
          %v502 = vrot.slane %v501, 1
          %v503 = vadd.f32 %v501, %v502
          %v504 = vmul.f32 %v474, %v474
          %v505 = vmul.f32 %v475, %v475
          %v506 = vmul.f32 %v476, %v476
          %v507 = vmul.f32 %v477, %v477
          %v508 = vmul.f32 %v478, %v478
          %v509 = vmul.f32 %v479, %v479
          %v510 = vmul.f32 %v480, %v480
          %v511 = vmul.f32 %v481, %v481
          %v512 = vsel %vm482, %v504, 0.0
          %v513 = vsel %vm482, %v505, 0.0
          %v514 = vadd.f32 %v512, %v513
          %v515 = vsel %vm482, %v506, 0.0
          %v516 = vadd.f32 %v514, %v515
          %v517 = vsel %vm482, %v507, 0.0
          %v518 = vadd.f32 %v516, %v517
          %v519 = vsel %vm482, %v508, 0.0
          %v520 = vadd.f32 %v518, %v519
          %v521 = vsel %vm482, %v509, 0.0
          %v522 = vadd.f32 %v520, %v521
          %v523 = vsel %vm482, %v510, 0.0
          %v524 = vadd.f32 %v522, %v523
          %v525 = vsel %vm482, %v511, 0.0
          %v526 = vadd.f32 %v524, %v525
          %v527 = vrot.slane %v526, 4
          %v528 = vadd.f32 %v526, %v527
          %v529 = vrot.slane %v528, 2
          %v530 = vadd.f32 %v528, %v529
          %v531 = vrot.slane %v530, 1
          %v532 = vadd.f32 %v530, %v531
          %v533 = vld [vmem:[#allocation2] sm:$0x3]
          %vm534 = vcmask 1040384
          %v535 = vsel %vm534, %v503, %v532
          %v536 = vadd.f32 %v533, %v535
          %vm537 = vcmask 123904
          %538 = vst.msk [vmem:[#allocation2] sm:$0x3] %vm537, %v536
        $region48: #{tpu_custom_call.1} parent=39 // pred_fallthru
          _
        %p539 = scmp.eq.s32.totalorder %s23, 1
        // Predicated region
        $region49: #{tpu_custom_call.1} parent=39 // pred_check
          %p540 = pneg %p539
        $region50: #{tpu_custom_call.1} parent=39 // pred_check_branch
          %542 = sbr.rel (%p540) target = $region52
        $region51: #{tpu_custom_call.1} parent=39 // pred_region
          // Predicated region
          $region53: #{tpu_custom_call.1} parent=51 // pred_check
            %p543 = pneg %p444
          $region54: #{tpu_custom_call.1} parent=51 // pred_check_branch
            %545 = sbr.rel (%p543) target = $region56
          $region55: #{tpu_custom_call.1} parent=51 // pred_region
            %v546 = vld [vmem:[#allocation2] sm:$0x1]
            %v547 = vmul.f32 %v546, 0.004
            %v548 = vld [vmem:[#allocation2 + $0x1] sm:$0x1]
            %v549 = vmul.f32 %v548, 0.004
            %v550 = vmul.f32 %v547, %v547
            %v551 = vsub.f32 %v549, %v550
            %v552 = vmax.f32 %v551, 0.0
            %v553 = vld [vmem:[%s3] sm:$0x1]
            %v554 = vadd.f32 %v552, 0.001
            %v555 = vrsqrt.pop %v554
            %v556 = vmul.f32 %v553, %v555
            %v557 = vld [vmem:[%s4] sm:$0x1]
            %v558 = vmul.f32 %v547, %v556
            %v559 = vsub.f32 %v557, %v558
            %v561 = vlaneseq
            %v562 = vshrl.u32 %v561, 7
            %v563 = vsub.s32 0, %v562
            %v564 = vrot.slane %v559, %v563
            %vm566 = vcmask 1040384
            %v567 = vsel %vm566, %v556, %v564
            %vm568 = vcmask 123904
            %569 = vst.msk [vmem:[#allocation2] sm:$0x3] %vm568, %v567
          $region56: #{tpu_custom_call.1} parent=51 // pred_fallthru
            _
          %v570 = vld [vmem:[#allocation2] sm:$0x1]
          %v571 = vld [vmem:[#allocation2 + $0x1] sm:$0x1]
          %v572 = vlaneseq
          %v573 = vshrl.u32 %v572, 7
          %v574 = vsub.s32 0, %v573
          %v575 = vrot.slane %v570, %v574
          %v576 = vmul.f32 %v378, %v575
          %v577 = vmul.f32 %v383, %v575
          %v578 = vmul.f32 %v388, %v575
          %v579 = vmul.f32 %v393, %v575
          %v580 = vmul.f32 %v398, %v575
          %v581 = vmul.f32 %v403, %v575
          %v582 = vmul.f32 %v408, %v575
          %v583 = vmul.f32 %v413, %v575
          %v584 = vlaneseq
          %v585 = vshrl.u32 %v584, 7
          %v586 = vsub.s32 0, %v585
          %v587 = vrot.slane %v571, %v586
          %v588 = vadd.f32 %v576, %v587
          %v589 = vadd.f32 %v577, %v587
          %v590 = vadd.f32 %v578, %v587
          %v591 = vadd.f32 %v579, %v587
          %v592 = vadd.f32 %v580, %v587
          %v593 = vadd.f32 %v581, %v587
          %v594 = vadd.f32 %v582, %v587
          %v595 = vadd.f32 %v583, %v587
          %v596 = vmax.f32 %v588, 0.0
          %v597 = vmax.f32 %v589, 0.0
          %v598 = vmax.f32 %v590, 0.0
          %v599 = vmax.f32 %v591, 0.0
          %v600 = vmax.f32 %v592, 0.0
          %v601 = vmax.f32 %v593, 0.0
          %v602 = vmax.f32 %v594, 0.0
          %v603 = vmax.f32 %v595, 0.0
          %v604 = vsel %vm435, 1, 0
          %v605 = vsel %vm436, 1, 0
          %v606 = vsel %vm437, 1, 0
          %v607 = vsel %vm438, 1, 0
          %v608 = vsel %vm439, 1, 0
          %v609 = vsel %vm440, 1, 0
          %v610 = vsel %vm441, 1, 0
          %v611 = vsel %vm442, 1, 0
          %vm612 = vcmp.eq.s32.totalorder %v604, 1
          %vm613 = vcmp.eq.s32.totalorder %v605, 1
          %vm614 = vcmp.eq.s32.totalorder %v606, 1
          %vm615 = vcmp.eq.s32.totalorder %v607, 1
          %vm616 = vcmp.eq.s32.totalorder %v608, 1
          %vm617 = vcmp.eq.s32.totalorder %v609, 1
          %vm618 = vcmp.eq.s32.totalorder %v610, 1
          %vm619 = vcmp.eq.s32.totalorder %v611, 1
          %v620 = vsel %vm612, %v596, 0.0
          %v621 = vsel %vm613, %v597, 0.0
          %v622 = vsel %vm614, %v598, 0.0
          %v623 = vsel %vm615, %v599, 0.0
          %v624 = vsel %vm616, %v600, 0.0
          %v625 = vsel %vm617, %v601, 0.0
          %v626 = vsel %vm618, %v602, 0.0
          %v627 = vsel %vm619, %v603, 0.0
          %v628 = vld [vmem:[%s264] sm:$0xff]
          %v629 = vld [vmem:[%s264 + $0x8] sm:$0xff]
          %v630 = vld [vmem:[%s264 + $0x10] sm:$0xff]
          %v631 = vld [vmem:[%s264 + $0x18] sm:$0xff]
          %v632 = vld [vmem:[%s264 + $0x20] sm:$0xff]
          %v633 = vld [vmem:[%s264 + $0x28] sm:$0xff]
          %v634 = vld [vmem:[%s264 + $0x30] sm:$0xff]
          %v635 = vld [vmem:[%s264 + $0x38] sm:$0xff]
          loop: start=0, step=1, limit=3
          $region57: #{tpu_custom_call.1} parent=51 // loop_pre_header
            _
          $region58: #{tpu_custom_call.1} parent=51 // loop_header
            %s637 = sphi 0, %s641
            %p638 = scmp.ge.s32.totalorder %s637, 3
          $region59: #{tpu_custom_call.1} parent=51 // loop_header_branch
            %640 = sbr.rel (%p638) target = $region63
          $region60: #{tpu_custom_call.1} parent=51 // loop_body
            %s642 = smul.u32 %s637, 8
            %v643 = vstv %s642
            %vm644 = vcmp.eq.s32.totalorder %v628, %v643
            %vm645 = vcmp.eq.s32.totalorder %v629, %v643
            %vm646 = vcmp.eq.s32.totalorder %v630, %v643
            %vm647 = vcmp.eq.s32.totalorder %v631, %v643
            %vm648 = vcmp.eq.s32.totalorder %v632, %v643
            %vm649 = vcmp.eq.s32.totalorder %v633, %v643
            %vm650 = vcmp.eq.s32.totalorder %v634, %v643
            %vm651 = vcmp.eq.s32.totalorder %v635, %v643
            %v652 = vsel %vm644, 1, 0
            %v653 = vsel %vm645, 1, 0
            %v654 = vsel %vm646, 1, 0
            %v655 = vsel %vm647, 1, 0
            %v656 = vsel %vm648, 1, 0
            %v657 = vsel %vm649, 1, 0
            %v658 = vsel %vm650, 1, 0
            %v659 = vsel %vm651, 1, 0
            %660 = vset.pattern.permute.xlu0 0
            %661 = vperm.xlu0 %660, %v652
            %v662 = vpop.permute.xlu0 %661
            %663 = vset.pattern.permute.xlu0 0
            %664 = vperm.xlu0 %663, %v653
            %v665 = vpop.permute.xlu0 %664
            %666 = vset.pattern.permute.xlu0 0
            %667 = vperm.xlu0 %666, %v654
            %v668 = vpop.permute.xlu0 %667
            %669 = vset.pattern.permute.xlu0 0
            %670 = vperm.xlu0 %669, %v655
            %v671 = vpop.permute.xlu0 %670
            %672 = vset.pattern.permute.xlu0 0
            %673 = vperm.xlu0 %672, %v656
            %v674 = vpop.permute.xlu0 %673
            %675 = vset.pattern.permute.xlu0 0
            %676 = vperm.xlu0 %675, %v657
            %v677 = vpop.permute.xlu0 %676
            %678 = vset.pattern.permute.xlu0 0
            %679 = vperm.xlu0 %678, %v658
            %v680 = vpop.permute.xlu0 %679
            %681 = vset.pattern.permute.xlu0 0
            %682 = vperm.xlu0 %681, %v659
            %v683 = vpop.permute.xlu0 %682
            %vm684 = vcmp.eq.s32.totalorder %v662, 1
            %vm685 = vcmp.eq.s32.totalorder %v665, 1
            %vm686 = vcmp.eq.s32.totalorder %v668, 1
            %vm687 = vcmp.eq.s32.totalorder %v671, 1
            %vm688 = vcmp.eq.s32.totalorder %v674, 1
            %vm689 = vcmp.eq.s32.totalorder %v677, 1
            %vm690 = vcmp.eq.s32.totalorder %v680, 1
            %vm691 = vcmp.eq.s32.totalorder %v683, 1
            %v692 = vsel %vm684, %v620, 0.0
            %v693 = vsel %vm685, %v621, 0.0
            %v694 = vsel %vm686, %v622, 0.0
            %v695 = vsel %vm687, %v623, 0.0
            %v696 = vsel %vm688, %v624, 0.0
            %v697 = vsel %vm689, %v625, 0.0
            %v698 = vsel %vm690, %v626, 0.0
            %v699 = vsel %vm691, %v627, 0.0
            %vm700 = vcmask 130048
            %v701 = vsel %vm700, %v692, -inf
            %v702 = vsel %vm700, %v693, -inf
            %v703 = vsel %vm700, %v694, -inf
            %v704 = vsel %vm700, %v695, -inf
            %v705 = vsel %vm700, %v696, -inf
            %v706 = vmax.f32 %v701, %v705
            %v707 = vsel %vm700, %v697, -inf
            %v708 = vmax.f32 %v702, %v707
            %v709 = vsel %vm700, %v698, -inf
            %v710 = vmax.f32 %v703, %v709
            %v711 = vsel %vm700, %v699, -inf
            %v712 = vmax.f32 %v704, %v711
            %v713 = vmax.f32 %v706, %v708
            %v714 = vmax.f32 %v710, %v712
            %v715 = vmax.f32 %v713, %v714
            %v716 = vrot.slane %v715, 4
            %v717 = vmax.f32 %v715, %v716
            %v718 = vrot.slane %v717, 2
            %v719 = vmax.f32 %v717, %v718
            %v720 = vrot.slane %v719, 1
            %v721 = vmax.f32 %v719, %v720
            %s722 = sadd.s32 %s642, 1
            %v723 = vstv %s722
            %vm724 = vcmp.eq.s32.totalorder %v628, %v723
            %vm725 = vcmp.eq.s32.totalorder %v629, %v723
            %vm726 = vcmp.eq.s32.totalorder %v630, %v723
            %vm727 = vcmp.eq.s32.totalorder %v631, %v723
            %vm728 = vcmp.eq.s32.totalorder %v632, %v723
            %vm729 = vcmp.eq.s32.totalorder %v633, %v723
            %vm730 = vcmp.eq.s32.totalorder %v634, %v723
            %vm731 = vcmp.eq.s32.totalorder %v635, %v723
            %v732 = vsel %vm724, 1, 0
            %v733 = vsel %vm725, 1, 0
            %v734 = vsel %vm726, 1, 0
            %v735 = vsel %vm727, 1, 0
            %v736 = vsel %vm728, 1, 0
            %v737 = vsel %vm729, 1, 0
            %v738 = vsel %vm730, 1, 0
            %v739 = vsel %vm731, 1, 0
            %740 = vset.pattern.permute.xlu0 0
            %741 = vperm.xlu0 %740, %v732
            %v742 = vpop.permute.xlu0 %741
            %743 = vset.pattern.permute.xlu0 0
            %744 = vperm.xlu0 %743, %v733
            %v745 = vpop.permute.xlu0 %744
            %746 = vset.pattern.permute.xlu0 0
            %747 = vperm.xlu0 %746, %v734
            %v748 = vpop.permute.xlu0 %747
            %749 = vset.pattern.permute.xlu0 0
            %750 = vperm.xlu0 %749, %v735
            %v751 = vpop.permute.xlu0 %750
            %752 = vset.pattern.permute.xlu0 0
            %753 = vperm.xlu0 %752, %v736
            %v754 = vpop.permute.xlu0 %753
            %755 = vset.pattern.permute.xlu0 0
            %756 = vperm.xlu0 %755, %v737
            %v757 = vpop.permute.xlu0 %756
            %758 = vset.pattern.permute.xlu0 0
            %759 = vperm.xlu0 %758, %v738
            %v760 = vpop.permute.xlu0 %759
            %761 = vset.pattern.permute.xlu0 0
            %762 = vperm.xlu0 %761, %v739
            %v763 = vpop.permute.xlu0 %762
            %vm764 = vcmp.eq.s32.totalorder %v742, 1
            %vm765 = vcmp.eq.s32.totalorder %v745, 1
            %vm766 = vcmp.eq.s32.totalorder %v748, 1
            %vm767 = vcmp.eq.s32.totalorder %v751, 1
            %vm768 = vcmp.eq.s32.totalorder %v754, 1
            %vm769 = vcmp.eq.s32.totalorder %v757, 1
            %vm770 = vcmp.eq.s32.totalorder %v760, 1
            %vm771 = vcmp.eq.s32.totalorder %v763, 1
            %v772 = vsel %vm764, %v620, 0.0
            %v773 = vsel %vm765, %v621, 0.0
            %v774 = vsel %vm766, %v622, 0.0
            %v775 = vsel %vm767, %v623, 0.0
            %v776 = vsel %vm768, %v624, 0.0
            %v777 = vsel %vm769, %v625, 0.0
            %v778 = vsel %vm770, %v626, 0.0
            %v779 = vsel %vm771, %v627, 0.0
            %v780 = vsel %vm700, %v772, -inf
            %v781 = vsel %vm700, %v773, -inf
            %v782 = vsel %vm700, %v774, -inf
            %v783 = vsel %vm700, %v775, -inf
            %v784 = vsel %vm700, %v776, -inf
            %v785 = vmax.f32 %v780, %v784
            %v786 = vsel %vm700, %v777, -inf
            %v787 = vmax.f32 %v781, %v786
            %v788 = vsel %vm700, %v778, -inf
            %v789 = vmax.f32 %v782, %v788
            %v790 = vsel %vm700, %v779, -inf
            %v791 = vmax.f32 %v783, %v790
            %v792 = vmax.f32 %v785, %v787
            %v793 = vmax.f32 %v789, %v791
            %v794 = vmax.f32 %v792, %v793
            %v795 = vrot.slane %v794, 4
            %v796 = vmax.f32 %v794, %v795
            %v797 = vrot.slane %v796, 2
            %v798 = vmax.f32 %v796, %v797
            %v799 = vrot.slane %v798, 1
            %v800 = vmax.f32 %v798, %v799
            %s801 = sadd.s32 %s642, 2
            %v802 = vstv %s801
            %vm803 = vcmp.eq.s32.totalorder %v628, %v802
            %vm804 = vcmp.eq.s32.totalorder %v629, %v802
            %vm805 = vcmp.eq.s32.totalorder %v630, %v802
            %vm806 = vcmp.eq.s32.totalorder %v631, %v802
            %vm807 = vcmp.eq.s32.totalorder %v632, %v802
            %vm808 = vcmp.eq.s32.totalorder %v633, %v802
            %vm809 = vcmp.eq.s32.totalorder %v634, %v802
            %vm810 = vcmp.eq.s32.totalorder %v635, %v802
            %v811 = vsel %vm803, 1, 0
            %v812 = vsel %vm804, 1, 0
            %v813 = vsel %vm805, 1, 0
            %v814 = vsel %vm806, 1, 0
            %v815 = vsel %vm807, 1, 0
            %v816 = vsel %vm808, 1, 0
            %v817 = vsel %vm809, 1, 0
            %v818 = vsel %vm810, 1, 0
            %819 = vset.pattern.permute.xlu0 0
            %820 = vperm.xlu0 %819, %v811
            %v821 = vpop.permute.xlu0 %820
            %822 = vset.pattern.permute.xlu0 0
            %823 = vperm.xlu0 %822, %v812
            %v824 = vpop.permute.xlu0 %823
            %825 = vset.pattern.permute.xlu0 0
            %826 = vperm.xlu0 %825, %v813
            %v827 = vpop.permute.xlu0 %826
            %828 = vset.pattern.permute.xlu0 0
            %829 = vperm.xlu0 %828, %v814
            %v830 = vpop.permute.xlu0 %829
            %831 = vset.pattern.permute.xlu0 0
            %832 = vperm.xlu0 %831, %v815
            %v833 = vpop.permute.xlu0 %832
            %834 = vset.pattern.permute.xlu0 0
            %835 = vperm.xlu0 %834, %v816
            %v836 = vpop.permute.xlu0 %835
            %837 = vset.pattern.permute.xlu0 0
            %838 = vperm.xlu0 %837, %v817
            %v839 = vpop.permute.xlu0 %838
            %840 = vset.pattern.permute.xlu0 0
            %841 = vperm.xlu0 %840, %v818
            %v842 = vpop.permute.xlu0 %841
            %vm843 = vcmp.eq.s32.totalorder %v821, 1
            %vm844 = vcmp.eq.s32.totalorder %v824, 1
            %vm845 = vcmp.eq.s32.totalorder %v827, 1
            %vm846 = vcmp.eq.s32.totalorder %v830, 1
            %vm847 = vcmp.eq.s32.totalorder %v833, 1
            %vm848 = vcmp.eq.s32.totalorder %v836, 1
            %vm849 = vcmp.eq.s32.totalorder %v839, 1
            %vm850 = vcmp.eq.s32.totalorder %v842, 1
            %v851 = vsel %vm843, %v620, 0.0
            %v852 = vsel %vm844, %v621, 0.0
            %v853 = vsel %vm845, %v622, 0.0
            %v854 = vsel %vm846, %v623, 0.0
            %v855 = vsel %vm847, %v624, 0.0
            %v856 = vsel %vm848, %v625, 0.0
            %v857 = vsel %vm849, %v626, 0.0
            %v858 = vsel %vm850, %v627, 0.0
            %v859 = vsel %vm700, %v851, -inf
            %v860 = vsel %vm700, %v852, -inf
            %v861 = vsel %vm700, %v853, -inf
            %v862 = vsel %vm700, %v854, -inf
            %v863 = vsel %vm700, %v855, -inf
            %v864 = vmax.f32 %v859, %v863
            %v865 = vsel %vm700, %v856, -inf
            %v866 = vmax.f32 %v860, %v865
            %v867 = vsel %vm700, %v857, -inf
            %v868 = vmax.f32 %v861, %v867
            %v869 = vsel %vm700, %v858, -inf
            %v870 = vmax.f32 %v862, %v869
            %v871 = vmax.f32 %v864, %v866
            %v872 = vmax.f32 %v868, %v870
            %v873 = vmax.f32 %v871, %v872
            %v874 = vrot.slane %v873, 4
            %v875 = vmax.f32 %v873, %v874
            %v876 = vrot.slane %v875, 2
            %v877 = vmax.f32 %v875, %v876
            %v878 = vrot.slane %v877, 1
            %v879 = vmax.f32 %v877, %v878
            %s880 = sadd.s32 %s642, 3
            %v881 = vstv %s880
            %vm882 = vcmp.eq.s32.totalorder %v628, %v881
            %vm883 = vcmp.eq.s32.totalorder %v629, %v881
            %vm884 = vcmp.eq.s32.totalorder %v630, %v881
            %vm885 = vcmp.eq.s32.totalorder %v631, %v881
            %vm886 = vcmp.eq.s32.totalorder %v632, %v881
            %vm887 = vcmp.eq.s32.totalorder %v633, %v881
            %vm888 = vcmp.eq.s32.totalorder %v634, %v881
            %vm889 = vcmp.eq.s32.totalorder %v635, %v881
            %v890 = vsel %vm882, 1, 0
            %v891 = vsel %vm883, 1, 0
            %v892 = vsel %vm884, 1, 0
            %v893 = vsel %vm885, 1, 0
            %v894 = vsel %vm886, 1, 0
            %v895 = vsel %vm887, 1, 0
            %v896 = vsel %vm888, 1, 0
            %v897 = vsel %vm889, 1, 0
            %898 = vset.pattern.permute.xlu0 0
            %899 = vperm.xlu0 %898, %v890
            %v900 = vpop.permute.xlu0 %899
            %901 = vset.pattern.permute.xlu0 0
            %902 = vperm.xlu0 %901, %v891
            %v903 = vpop.permute.xlu0 %902
            %904 = vset.pattern.permute.xlu0 0
            %905 = vperm.xlu0 %904, %v892
            %v906 = vpop.permute.xlu0 %905
            %907 = vset.pattern.permute.xlu0 0
            %908 = vperm.xlu0 %907, %v893
            %v909 = vpop.permute.xlu0 %908
            %910 = vset.pattern.permute.xlu0 0
            %911 = vperm.xlu0 %910, %v894
            %v912 = vpop.permute.xlu0 %911
            %913 = vset.pattern.permute.xlu0 0
            %914 = vperm.xlu0 %913, %v895
            %v915 = vpop.permute.xlu0 %914
            %916 = vset.pattern.permute.xlu0 0
            %917 = vperm.xlu0 %916, %v896
            %v918 = vpop.permute.xlu0 %917
            %919 = vset.pattern.permute.xlu0 0
            %920 = vperm.xlu0 %919, %v897
            %v921 = vpop.permute.xlu0 %920
            %vm922 = vcmp.eq.s32.totalorder %v900, 1
            %vm923 = vcmp.eq.s32.totalorder %v903, 1
            %vm924 = vcmp.eq.s32.totalorder %v906, 1
            %vm925 = vcmp.eq.s32.totalorder %v909, 1
            %vm926 = vcmp.eq.s32.totalorder %v912, 1
            %vm927 = vcmp.eq.s32.totalorder %v915, 1
            %vm928 = vcmp.eq.s32.totalorder %v918, 1
            %vm929 = vcmp.eq.s32.totalorder %v921, 1
            %v930 = vsel %vm922, %v620, 0.0
            %v931 = vsel %vm923, %v621, 0.0
            %v932 = vsel %vm924, %v622, 0.0
            %v933 = vsel %vm925, %v623, 0.0
            %v934 = vsel %vm926, %v624, 0.0
            %v935 = vsel %vm927, %v625, 0.0
            %v936 = vsel %vm928, %v626, 0.0
            %v937 = vsel %vm929, %v627, 0.0
            %v938 = vsel %vm700, %v930, -inf
            %v939 = vsel %vm700, %v931, -inf
            %v940 = vsel %vm700, %v932, -inf
            %v941 = vsel %vm700, %v933, -inf
            %v942 = vsel %vm700, %v934, -inf
            %v943 = vmax.f32 %v938, %v942
            %v944 = vsel %vm700, %v935, -inf
            %v945 = vmax.f32 %v939, %v944
            %v946 = vsel %vm700, %v936, -inf
            %v947 = vmax.f32 %v940, %v946
            %v948 = vsel %vm700, %v937, -inf
            %v949 = vmax.f32 %v941, %v948
            %v950 = vmax.f32 %v943, %v945
            %v951 = vmax.f32 %v947, %v949
            %v952 = vmax.f32 %v950, %v951
            %v953 = vrot.slane %v952, 4
            %v954 = vmax.f32 %v952, %v953
            %v955 = vrot.slane %v954, 2
            %v956 = vmax.f32 %v954, %v955
            %v957 = vrot.slane %v956, 1
            %v958 = vmax.f32 %v956, %v957
            %s959 = sadd.s32 %s642, 4
            %v960 = vstv %s959
            %vm961 = vcmp.eq.s32.totalorder %v628, %v960
            %vm962 = vcmp.eq.s32.totalorder %v629, %v960
            %vm963 = vcmp.eq.s32.totalorder %v630, %v960
            %vm964 = vcmp.eq.s32.totalorder %v631, %v960
            %vm965 = vcmp.eq.s32.totalorder %v632, %v960
            %vm966 = vcmp.eq.s32.totalorder %v633, %v960
            %vm967 = vcmp.eq.s32.totalorder %v634, %v960
            %vm968 = vcmp.eq.s32.totalorder %v635, %v960
            %v969 = vsel %vm961, 1, 0
            %v970 = vsel %vm962, 1, 0
            %v971 = vsel %vm963, 1, 0
            %v972 = vsel %vm964, 1, 0
            %v973 = vsel %vm965, 1, 0
            %v974 = vsel %vm966, 1, 0
            %v975 = vsel %vm967, 1, 0
            %v976 = vsel %vm968, 1, 0
            %977 = vset.pattern.permute.xlu0 0
            %978 = vperm.xlu0 %977, %v969
            %v979 = vpop.permute.xlu0 %978
            %980 = vset.pattern.permute.xlu0 0
            %981 = vperm.xlu0 %980, %v970
            %v982 = vpop.permute.xlu0 %981
            %983 = vset.pattern.permute.xlu0 0
            %984 = vperm.xlu0 %983, %v971
            %v985 = vpop.permute.xlu0 %984
            %986 = vset.pattern.permute.xlu0 0
            %987 = vperm.xlu0 %986, %v972
            %v988 = vpop.permute.xlu0 %987
            %989 = vset.pattern.permute.xlu0 0
            %990 = vperm.xlu0 %989, %v973
            %v991 = vpop.permute.xlu0 %990
            %992 = vset.pattern.permute.xlu0 0
            %993 = vperm.xlu0 %992, %v974
            %v994 = vpop.permute.xlu0 %993
            %995 = vset.pattern.permute.xlu0 0
            %996 = vperm.xlu0 %995, %v975
            %v997 = vpop.permute.xlu0 %996
            %998 = vset.pattern.permute.xlu0 0
            %999 = vperm.xlu0 %998, %v976
            %v1000 = vpop.permute.xlu0 %999
            %vm1001 = vcmp.eq.s32.totalorder %v979, 1
            %vm1002 = vcmp.eq.s32.totalorder %v982, 1
            %vm1003 = vcmp.eq.s32.totalorder %v985, 1
            %vm1004 = vcmp.eq.s32.totalorder %v988, 1
            %vm1005 = vcmp.eq.s32.totalorder %v991, 1
            %vm1006 = vcmp.eq.s32.totalorder %v994, 1
            %vm1007 = vcmp.eq.s32.totalorder %v997, 1
            %vm1008 = vcmp.eq.s32.totalorder %v1000, 1
            %v1009 = vsel %vm1001, %v620, 0.0
            %v1010 = vsel %vm1002, %v621, 0.0
            %v1011 = vsel %vm1003, %v622, 0.0
            %v1012 = vsel %vm1004, %v623, 0.0
            %v1013 = vsel %vm1005, %v624, 0.0
            %v1014 = vsel %vm1006, %v625, 0.0
            %v1015 = vsel %vm1007, %v626, 0.0
            %v1016 = vsel %vm1008, %v627, 0.0
            %v1017 = vsel %vm700, %v1009, -inf
            %v1018 = vsel %vm700, %v1010, -inf
            %v1019 = vsel %vm700, %v1011, -inf
            %v1020 = vsel %vm700, %v1012, -inf
            %v1021 = vsel %vm700, %v1013, -inf
            %v1022 = vmax.f32 %v1017, %v1021
            %v1023 = vsel %vm700, %v1014, -inf
            %v1024 = vmax.f32 %v1018, %v1023
            %v1025 = vsel %vm700, %v1015, -inf
            %v1026 = vmax.f32 %v1019, %v1025
            %v1027 = vsel %vm700, %v1016, -inf
            %v1028 = vmax.f32 %v1020, %v1027
            %v1029 = vmax.f32 %v1022, %v1024
            %v1030 = vmax.f32 %v1026, %v1028
            %v1031 = vmax.f32 %v1029, %v1030
            %v1032 = vrot.slane %v1031, 4
            %v1033 = vmax.f32 %v1031, %v1032
            %v1034 = vrot.slane %v1033, 2
            %v1035 = vmax.f32 %v1033, %v1034
            %v1036 = vrot.slane %v1035, 1
            %v1037 = vmax.f32 %v1035, %v1036
            %s1038 = sadd.s32 %s642, 5
            %v1039 = vstv %s1038
            %vm1040 = vcmp.eq.s32.totalorder %v628, %v1039
            %vm1041 = vcmp.eq.s32.totalorder %v629, %v1039
            %vm1042 = vcmp.eq.s32.totalorder %v630, %v1039
            %vm1043 = vcmp.eq.s32.totalorder %v631, %v1039
            %vm1044 = vcmp.eq.s32.totalorder %v632, %v1039
            %vm1045 = vcmp.eq.s32.totalorder %v633, %v1039
            %vm1046 = vcmp.eq.s32.totalorder %v634, %v1039
            %vm1047 = vcmp.eq.s32.totalorder %v635, %v1039
            %v1048 = vsel %vm1040, 1, 0
            %v1049 = vsel %vm1041, 1, 0
            %v1050 = vsel %vm1042, 1, 0
            %v1051 = vsel %vm1043, 1, 0
            %v1052 = vsel %vm1044, 1, 0
            %v1053 = vsel %vm1045, 1, 0
            %v1054 = vsel %vm1046, 1, 0
            %v1055 = vsel %vm1047, 1, 0
            %1056 = vset.pattern.permute.xlu0 0
            %1057 = vperm.xlu0 %1056, %v1048
            %v1058 = vpop.permute.xlu0 %1057
            %1059 = vset.pattern.permute.xlu0 0
            %1060 = vperm.xlu0 %1059, %v1049
            %v1061 = vpop.permute.xlu0 %1060
            %1062 = vset.pattern.permute.xlu0 0
            %1063 = vperm.xlu0 %1062, %v1050
            %v1064 = vpop.permute.xlu0 %1063
            %1065 = vset.pattern.permute.xlu0 0
            %1066 = vperm.xlu0 %1065, %v1051
            %v1067 = vpop.permute.xlu0 %1066
            %1068 = vset.pattern.permute.xlu0 0
            %1069 = vperm.xlu0 %1068, %v1052
            %v1070 = vpop.permute.xlu0 %1069
            %1071 = vset.pattern.permute.xlu0 0
            %1072 = vperm.xlu0 %1071, %v1053
            %v1073 = vpop.permute.xlu0 %1072
            %1074 = vset.pattern.permute.xlu0 0
            %1075 = vperm.xlu0 %1074, %v1054
            %v1076 = vpop.permute.xlu0 %1075
            %1077 = vset.pattern.permute.xlu0 0
            %1078 = vperm.xlu0 %1077, %v1055
            %v1079 = vpop.permute.xlu0 %1078
            %vm1080 = vcmp.eq.s32.totalorder %v1058, 1
            %vm1081 = vcmp.eq.s32.totalorder %v1061, 1
            %vm1082 = vcmp.eq.s32.totalorder %v1064, 1
            %vm1083 = vcmp.eq.s32.totalorder %v1067, 1
            %vm1084 = vcmp.eq.s32.totalorder %v1070, 1
            %vm1085 = vcmp.eq.s32.totalorder %v1073, 1
            %vm1086 = vcmp.eq.s32.totalorder %v1076, 1
            %vm1087 = vcmp.eq.s32.totalorder %v1079, 1
            %v1088 = vsel %vm1080, %v620, 0.0
            %v1089 = vsel %vm1081, %v621, 0.0
            %v1090 = vsel %vm1082, %v622, 0.0
            %v1091 = vsel %vm1083, %v623, 0.0
            %v1092 = vsel %vm1084, %v624, 0.0
            %v1093 = vsel %vm1085, %v625, 0.0
            %v1094 = vsel %vm1086, %v626, 0.0
            %v1095 = vsel %vm1087, %v627, 0.0
            %v1096 = vsel %vm700, %v1088, -inf
            %v1097 = vsel %vm700, %v1089, -inf
            %v1098 = vsel %vm700, %v1090, -inf
            %v1099 = vsel %vm700, %v1091, -inf
            %v1100 = vsel %vm700, %v1092, -inf
            %v1101 = vmax.f32 %v1096, %v1100
            %v1102 = vsel %vm700, %v1093, -inf
            %v1103 = vmax.f32 %v1097, %v1102
            %v1104 = vsel %vm700, %v1094, -inf
            %v1105 = vmax.f32 %v1098, %v1104
            %v1106 = vsel %vm700, %v1095, -inf
            %v1107 = vmax.f32 %v1099, %v1106
            %v1108 = vmax.f32 %v1101, %v1103
            %v1109 = vmax.f32 %v1105, %v1107
            %v1110 = vmax.f32 %v1108, %v1109
            %v1111 = vrot.slane %v1110, 4
            %v1112 = vmax.f32 %v1110, %v1111
            %v1113 = vrot.slane %v1112, 2
            %v1114 = vmax.f32 %v1112, %v1113
            %v1115 = vrot.slane %v1114, 1
            %v1116 = vmax.f32 %v1114, %v1115
            %s1117 = sadd.s32 %s642, 6
            %v1118 = vstv %s1117
            %vm1119 = vcmp.eq.s32.totalorder %v628, %v1118
            %vm1120 = vcmp.eq.s32.totalorder %v629, %v1118
            %vm1121 = vcmp.eq.s32.totalorder %v630, %v1118
            %vm1122 = vcmp.eq.s32.totalorder %v631, %v1118
            %vm1123 = vcmp.eq.s32.totalorder %v632, %v1118
            %vm1124 = vcmp.eq.s32.totalorder %v633, %v1118
            %vm1125 = vcmp.eq.s32.totalorder %v634, %v1118
            %vm1126 = vcmp.eq.s32.totalorder %v635, %v1118
            %v1127 = vsel %vm1119, 1, 0
            %v1128 = vsel %vm1120, 1, 0
            %v1129 = vsel %vm1121, 1, 0
            %v1130 = vsel %vm1122, 1, 0
            %v1131 = vsel %vm1123, 1, 0
            %v1132 = vsel %vm1124, 1, 0
            %v1133 = vsel %vm1125, 1, 0
            %v1134 = vsel %vm1126, 1, 0
            %1135 = vset.pattern.permute.xlu0 0
            %1136 = vperm.xlu0 %1135, %v1127
            %v1137 = vpop.permute.xlu0 %1136
            %1138 = vset.pattern.permute.xlu0 0
            %1139 = vperm.xlu0 %1138, %v1128
            %v1140 = vpop.permute.xlu0 %1139
            %1141 = vset.pattern.permute.xlu0 0
            %1142 = vperm.xlu0 %1141, %v1129
            %v1143 = vpop.permute.xlu0 %1142
            %1144 = vset.pattern.permute.xlu0 0
            %1145 = vperm.xlu0 %1144, %v1130
            %v1146 = vpop.permute.xlu0 %1145
            %1147 = vset.pattern.permute.xlu0 0
            %1148 = vperm.xlu0 %1147, %v1131
            %v1149 = vpop.permute.xlu0 %1148
            %1150 = vset.pattern.permute.xlu0 0
            %1151 = vperm.xlu0 %1150, %v1132
            %v1152 = vpop.permute.xlu0 %1151
            %1153 = vset.pattern.permute.xlu0 0
            %1154 = vperm.xlu0 %1153, %v1133
            %v1155 = vpop.permute.xlu0 %1154
            %1156 = vset.pattern.permute.xlu0 0
            %1157 = vperm.xlu0 %1156, %v1134
            %v1158 = vpop.permute.xlu0 %1157
            %vm1159 = vcmp.eq.s32.totalorder %v1137, 1
            %vm1160 = vcmp.eq.s32.totalorder %v1140, 1
            %vm1161 = vcmp.eq.s32.totalorder %v1143, 1
            %vm1162 = vcmp.eq.s32.totalorder %v1146, 1
            %vm1163 = vcmp.eq.s32.totalorder %v1149, 1
            %vm1164 = vcmp.eq.s32.totalorder %v1152, 1
            %vm1165 = vcmp.eq.s32.totalorder %v1155, 1
            %vm1166 = vcmp.eq.s32.totalorder %v1158, 1
            %v1167 = vsel %vm1159, %v620, 0.0
            %v1168 = vsel %vm1160, %v621, 0.0
            %v1169 = vsel %vm1161, %v622, 0.0
            %v1170 = vsel %vm1162, %v623, 0.0
            %v1171 = vsel %vm1163, %v624, 0.0
            %v1172 = vsel %vm1164, %v625, 0.0
            %v1173 = vsel %vm1165, %v626, 0.0
            %v1174 = vsel %vm1166, %v627, 0.0
            %v1175 = vsel %vm700, %v1167, -inf
            %v1176 = vsel %vm700, %v1168, -inf
            %v1177 = vsel %vm700, %v1169, -inf
            %v1178 = vsel %vm700, %v1170, -inf
            %v1179 = vsel %vm700, %v1171, -inf
            %v1180 = vmax.f32 %v1175, %v1179
            %v1181 = vsel %vm700, %v1172, -inf
            %v1182 = vmax.f32 %v1176, %v1181
            %v1183 = vsel %vm700, %v1173, -inf
            %v1184 = vmax.f32 %v1177, %v1183
            %v1185 = vsel %vm700, %v1174, -inf
            %v1186 = vmax.f32 %v1178, %v1185
            %v1187 = vmax.f32 %v1180, %v1182
            %v1188 = vmax.f32 %v1184, %v1186
            %v1189 = vmax.f32 %v1187, %v1188
            %v1190 = vrot.slane %v1189, 4
            %v1191 = vmax.f32 %v1189, %v1190
            %v1192 = vrot.slane %v1191, 2
            %v1193 = vmax.f32 %v1191, %v1192
            %v1194 = vrot.slane %v1193, 1
            %v1195 = vmax.f32 %v1193, %v1194
            %s1196 = sadd.s32 %s642, 7
            %v1197 = vstv %s1196
            %vm1198 = vcmp.eq.s32.totalorder %v628, %v1197
            %vm1199 = vcmp.eq.s32.totalorder %v629, %v1197
            %vm1200 = vcmp.eq.s32.totalorder %v630, %v1197
            %vm1201 = vcmp.eq.s32.totalorder %v631, %v1197
            %vm1202 = vcmp.eq.s32.totalorder %v632, %v1197
            %vm1203 = vcmp.eq.s32.totalorder %v633, %v1197
            %vm1204 = vcmp.eq.s32.totalorder %v634, %v1197
            %vm1205 = vcmp.eq.s32.totalorder %v635, %v1197
            %v1206 = vsel %vm1198, 1, 0
            %v1207 = vsel %vm1199, 1, 0
            %v1208 = vsel %vm1200, 1, 0
            %v1209 = vsel %vm1201, 1, 0
            %v1210 = vsel %vm1202, 1, 0
            %v1211 = vsel %vm1203, 1, 0
            %v1212 = vsel %vm1204, 1, 0
            %v1213 = vsel %vm1205, 1, 0
            %1214 = vset.pattern.permute.xlu0 0
            %1215 = vperm.xlu0 %1214, %v1206
            %v1216 = vpop.permute.xlu0 %1215
            %1217 = vset.pattern.permute.xlu0 0
            %1218 = vperm.xlu0 %1217, %v1207
            %v1219 = vpop.permute.xlu0 %1218
            %1220 = vset.pattern.permute.xlu0 0
            %1221 = vperm.xlu0 %1220, %v1208
            %v1222 = vpop.permute.xlu0 %1221
            %1223 = vset.pattern.permute.xlu0 0
            %1224 = vperm.xlu0 %1223, %v1209
            %v1225 = vpop.permute.xlu0 %1224
            %1226 = vset.pattern.permute.xlu0 0
            %1227 = vperm.xlu0 %1226, %v1210
            %v1228 = vpop.permute.xlu0 %1227
            %1229 = vset.pattern.permute.xlu0 0
            %1230 = vperm.xlu0 %1229, %v1211
            %v1231 = vpop.permute.xlu0 %1230
            %1232 = vset.pattern.permute.xlu0 0
            %1233 = vperm.xlu0 %1232, %v1212
            %v1234 = vpop.permute.xlu0 %1233
            %1235 = vset.pattern.permute.xlu0 0
            %1236 = vperm.xlu0 %1235, %v1213
            %v1237 = vpop.permute.xlu0 %1236
            %vm1238 = vcmp.eq.s32.totalorder %v1216, 1
            %vm1239 = vcmp.eq.s32.totalorder %v1219, 1
            %vm1240 = vcmp.eq.s32.totalorder %v1222, 1
            %vm1241 = vcmp.eq.s32.totalorder %v1225, 1
            %vm1242 = vcmp.eq.s32.totalorder %v1228, 1
            %vm1243 = vcmp.eq.s32.totalorder %v1231, 1
            %vm1244 = vcmp.eq.s32.totalorder %v1234, 1
            %vm1245 = vcmp.eq.s32.totalorder %v1237, 1
            %v1246 = vsel %vm1238, %v620, 0.0
            %v1247 = vsel %vm1239, %v621, 0.0
            %v1248 = vsel %vm1240, %v622, 0.0
            %v1249 = vsel %vm1241, %v623, 0.0
            %v1250 = vsel %vm1242, %v624, 0.0
            %v1251 = vsel %vm1243, %v625, 0.0
            %v1252 = vsel %vm1244, %v626, 0.0
            %v1253 = vsel %vm1245, %v627, 0.0
            %v1254 = vsel %vm700, %v1246, -inf
            %v1255 = vsel %vm700, %v1247, -inf
            %v1256 = vsel %vm700, %v1248, -inf
            %v1257 = vsel %vm700, %v1249, -inf
            %v1258 = vsel %vm700, %v1250, -inf
            %v1259 = vmax.f32 %v1254, %v1258
            %v1260 = vsel %vm700, %v1251, -inf
            %v1261 = vmax.f32 %v1255, %v1260
            %v1262 = vsel %vm700, %v1252, -inf
            %v1263 = vmax.f32 %v1256, %v1262
            %v1264 = vsel %vm700, %v1253, -inf
            %v1265 = vmax.f32 %v1257, %v1264
            %v1266 = vmax.f32 %v1259, %v1261
            %v1267 = vmax.f32 %v1263, %v1265
            %v1268 = vmax.f32 %v1266, %v1267
            %v1269 = vrot.slane %v1268, 4
            %v1270 = vmax.f32 %v1268, %v1269
            %v1271 = vrot.slane %v1270, 2
            %v1272 = vmax.f32 %v1270, %v1271
            %v1273 = vrot.slane %v1272, 1
            %v1274 = vmax.f32 %v1272, %v1273
            %vm1275 = vcmask 1040384
            %v1276 = vsel %vm1275, %v721, %v800
            %v1277 = vsel %vm307, %v1276, %v879
            %vm1278 = vcmask 1042432
            %v1279 = vsel %vm1278, %v1277, %v958
            %vm1280 = vcmask 1043456
            %v1281 = vsel %vm1280, %v1279, %v1037
            %vm1282 = vcmask 1044480
            %v1283 = vsel %vm1282, %v1281, %v1116
            %vm1284 = vcmask 1045504
            %v1285 = vsel %vm1284, %v1283, %v1195
            %vm1286 = vcmask 1046528
            %v1287 = vsel %vm1286, %v1285, %v1274
            %s1288 = scalar_lea.vmem %s6, %s642
            %v1289 = vld [vmem:[%s1288] sm:$0xff]
            %v1290 = vmax.f32 %v1289, %v1287
            %1291 = vst.msk [vmem:[%s1288] sm:$0xff] %vm700, %v1290
          $region61: #{tpu_custom_call.1} parent=51 // loop_footer
            %s641 = sadd.s32 1, %s637
          $region62: #{tpu_custom_call.1} parent=51 // loop_footer_branch
            %636 = sbr.rel target = $region58
          $region63: #{tpu_custom_call.1} parent=51 // loop_exit
            _
        $region52: #{tpu_custom_call.1} parent=39 // pred_fallthru
          _
        // Predicated region
        $region64: #{tpu_custom_call.1} parent=39 // pred_check
          %p1292 = pneg %p159
        $region65: #{tpu_custom_call.1} parent=39 // pred_check_branch
          %1294 = sbr.rel (%p1292) target = $region67
        $region66: #{tpu_custom_call.1} parent=39 // pred_region
          %s1296 = ssub.s32 32, 32
          %1297 = vsyncadd [#allocation3], %s1296
          %s1299 = sshll.u32 [#allocation2], 4
          %s1300 = int_to_ptr.vmem [resolvable:$true] %s1299
          %1302 = dma.vmem_to_hbm [thread:$0]  %s1300, 32, %s5, [#allocation3]
        $region67: #{tpu_custom_call.1} parent=39 // pred_fallthru
          _
        // Predicated region
        $region68: #{tpu_custom_call.1} parent=39 // pred_check
          %p1303 = pneg %p180
        $region69: #{tpu_custom_call.1} parent=39 // pred_check_branch
          %1305 = sbr.rel (%p1303) target = $region71
        $region70: #{tpu_custom_call.1} parent=39 // pred_region
          _
        $region71: #{tpu_custom_call.1} parent=39 // pred_fallthru
          _
        // Predicated region
        $region72: #{tpu_custom_call.1} parent=39 // pred_check
          %p1306 = pneg %p159
        $region73: #{tpu_custom_call.1} parent=39 // pred_check_branch
          %1308 = sbr.rel (%p1306) target = $region75
        $region74: #{tpu_custom_call.1} parent=39 // pred_region
          %1309 = dma.done [#allocation3], 32
        $region75: #{tpu_custom_call.1} parent=39 // pred_fallthru
          _
        // Predicated region
        $region76: #{tpu_custom_call.1} parent=39 // pred_check
          %p1310 = pneg %p180
        $region77: #{tpu_custom_call.1} parent=39 // pred_check_branch
          %1312 = sbr.rel (%p1310) target = $region79
        $region78: #{tpu_custom_call.1} parent=39 // pred_region
          _
        $region79: #{tpu_custom_call.1} parent=39 // pred_fallthru
          _
      $region40: #{tpu_custom_call.1} parent=5 // pred_fallthru
        _
      %p1313 = scmp.le.s32.totalorder 2, %s14
      // Predicated region
      $region80: #{tpu_custom_call.1} parent=5 // pred_check
        %p1314 = pneg %p1313
      $region81: #{tpu_custom_call.1} parent=5 // pred_check_branch
        %1316 = sbr.rel (%p1314) target = $region83
      $region82: #{tpu_custom_call.1} parent=5 // pred_region
        %s1317 = ssub.s32 %s14, 2
      $region83: #{tpu_custom_call.1} parent=5 // pred_fallthru
        _
    $region6: #{tpu_custom_call.1} parent=1 // loop_footer
      %s18 = sadd.s32 1, %s14
    $region7: #{tpu_custom_call.1} parent=1 // loop_footer_branch
      %13 = sbr.rel target = $region3
    $region8: #{tpu_custom_call.1} parent=1 // loop_exit
      _
    %1318 = vsyncpa [#allocation3], 1
    %s1319 = scalar_lea.sflag [#allocation3], 1
    %1320 = vsyncpa %s1319, 1

</llo_original>
